<compile_context>
chip_gen: v7x
topology: tpu7x:2x2x1
jax: 0.10.0
libtpu: 0.0.40
codegen_flags: <defaults>
</compile_context>

<pallas_src>
import math
import numpy as np
import jax
import jax.numpy as jnp
from jax.experimental import pallas as pl
from jax.experimental.pallas import tpu as pltpu

# ----------------------------- small synthetic config -----------------------------
BATCH           = 2
NUM_PASSAGES    = 2
MAXSEQLEN       = 16
MAXQLEN_CFG     = 4
MAXQLEN         = MAXQLEN_CFG + 1          # query window incl. segment-0 [SEP]
MAXDOCLEN       = MAXSEQLEN - 1            # everything after [CLS]
HIDDEN          = 32
VOCAB           = 100
NUM_BERT_LAYERS = 3                        # -> 4 hidden states (embeddings + 3 layers)
SIMMAT_LAYERS   = (1, 3)
CLS_MODE        = "avg"                    # 'avg' | 'max'
COMBINE_HIDDEN  = 16

MUS_CFG   = [-0.9, -0.7, -0.5, -0.3, -0.1, 0.1, 0.3, 0.5, 0.7, 0.9]
SIGMA     = 0.1
MUS       = np.array(MUS_CFG + [1.0], np.float32)
SIGMAS    = np.array([SIGMA] * len(MUS_CFG) + [0.01], np.float32)
NUM_KERNELS  = MUS.shape[0]                # 11 (RbfKernelBank.count())
NUM_LAYERS   = len(SIMMAT_LAYERS)
COMBINE_SIZE = NUM_KERNELS * NUM_LAYERS + HIDDEN


# ----------------------------- fused CEDR-KNRM Pallas kernel -----------------------
def _cedr_kernel(lid_ref, emb_ref, qmask_ref, qmask0_ref, dmask_ref, cls_ref,
                 mus_ref, inv_ref, w1c_ref, w1k_ref, b1_ref, w2_ref, b2_ref,
                 out_ref, h_acc):
    # grid = (batch, layer); layer is the inner "arbitrary" reduction axis.
    l = pl.program_id(1)

    # layer 0: start the combine-MLP hidden activation with the CLS branch.
    @pl.when(l == 0)
    def _():
        h_acc[...] = (jnp.dot(cls_ref[...], w1c_ref[...],
                              preferred_element_type=jnp.float32) + b1_ref[...])

    # ---- masked cosine simmats, all passages concatenated along the doc/lane axis ----
    sim_blocks = []
    for p in range(NUM_PASSAGES):                       # tiny static unroll over passages
        e = emb_ref[p].astype(jnp.float32)              # (L, H) bf16 slab -> f32 for norms
        d = e[1:, :]                                    # (D, H)  doc = everything after [CLS]
        # rsqrt(x + eps) on the EUP; the synthetic encoder never emits all-zero rows, so the
        # epsilon placement difference vs the reference (sqrt(x)+1e-9) is immaterial here.
        dh = d * jax.lax.rsqrt(jnp.sum(d * d, axis=1, keepdims=True) + 1e-12)
        # query rows are a sub-slice of the doc rows -> reuse the normalization; fold the
        # per-passage (pre-exp) query mask into the MXU LHS operand.
        qh = dh[:MAXQLEN, :] * qmask_ref[p]             # (Q, H)
        sim_blocks.append(
            jax.lax.dot_general(qh.astype(jnp.bfloat16), dh.astype(jnp.bfloat16),
                                (((1,), (1,)), ((), ())),
                                preferred_element_type=jnp.float32))   # (Q, D) cosine
    sims_all = jnp.concatenate(sim_blocks, axis=1)      # (Q, P*D) lane-dense simmat

    # ---- RBF kernel bank vectorized over K: one exp / mask / lane-reduce pass ----
    diff = sims_all[None, :, :] - mus_ref[...]          # (K, Q, P*D)
    rbf  = jnp.exp(-(diff * diff) * inv_ref[...])       # single EUP pass
    rbf  = rbf * dmask_ref[...][None, :, :]             # post-exp doc mask (VPU) -- required!
    pooled = jnp.sum(rbf, axis=2)                       # (K, Q) lane reduce (XLU), no MXU matvec
    pooled = pooled * qmask0_ref[...]                   # passage-0 query mask (reference quirk)
    feats = jnp.log(jnp.maximum(pooled, 1e-10)) * 0.01  # (K, Q)
    layer_feat = jnp.sum(feats, axis=1, keepdims=True)  # (K, 1)

    # fold this layer's KNRM features into the combine-MLP hidden activation
    h_acc[...] += jnp.sum(layer_feat * w1k_ref[...], axis=0, keepdims=True)   # (1, CH)

    # last layer: second Linear -> score
    @pl.when(l == pl.num_programs(1) - 1)
    def _():
        out_ref[...] = (jnp.dot(h_acc[...], w2_ref[...],
                                preferred_element_type=jnp.float32) + b2_ref[...])


def cedr_pallas(layer_ids, emb, qmask, qmask0, dmask, cls_feat,
                mus_arr, inv_arr, w1_cls, w1_knrm, b1, w2, b2):
    NH, B, P, L, H = emb.shape
    NL = int(layer_ids.shape[0])
    Q = qmask.shape[2]
    PD = dmask.shape[2]
    K = w1_knrm.shape[1]
    CH = w1_cls.shape[1]
    out = pl.pallas_call(
        _cedr_kernel,
        out_shape=jax.ShapeDtypeStruct((B, 1, 1), jnp.float32),
        grid_spec=pltpu.PrefetchScalarGridSpec(
            num_scalar_prefetch=1,
            grid=(B, NL),
            in_specs=[
                # hidden states (bf16): layer selected via the scalar-prefetched index array
                pl.BlockSpec((None, None, P, L, H),
                             lambda b, l, lid: (lid[l], b, 0, 0, 0)),
                pl.BlockSpec((None, P, Q, 1), lambda b, l, lid: (b, 0, 0, 0)),   # per-passage qmask col
                pl.BlockSpec((None, 1, Q),    lambda b, l, lid: (b, 0, 0)),      # passage-0 qmask row
                pl.BlockSpec((None, 1, PD),   lambda b, l, lid: (b, 0, 0)),      # lane-major doc mask
                pl.BlockSpec((None, 1, H),    lambda b, l, lid: (b, 0, 0)),      # CLS features
                pl.BlockSpec((K, 1, 1),       lambda b, l, lid: (0, 0, 0)),      # mus
                pl.BlockSpec((K, 1, 1),       lambda b, l, lid: (0, 0, 0)),      # 0.5 / sigma^2
                pl.BlockSpec((H, CH),         lambda b, l, lid: (0, 0)),         # W1 (cls block)
                pl.BlockSpec((None, K, CH),   lambda b, l, lid: (l, 0, 0)),      # W1 (this layer's K rows)
                pl.BlockSpec((1, CH),         lambda b, l, lid: (0, 0)),         # b1
                pl.BlockSpec((CH, 1),         lambda b, l, lid: (0, 0)),         # W2
                pl.BlockSpec((1, 1),          lambda b, l, lid: (0, 0)),         # b2
            ],
            out_specs=pl.BlockSpec((None, 1, 1), lambda b, l, lid: (b, 0, 0)),
            scratch_shapes=[pltpu.VMEM((1, CH), jnp.float32)],
        ),
        compiler_params=pltpu.CompilerParams(
            dimension_semantics=("parallel", "arbitrary"),
            vmem_limit_bytes=64 * 1024 * 1024),
    )(layer_ids, emb, qmask, qmask0, dmask, cls_feat, mus_arr, inv_arr,
      w1_cls, w1_knrm, b1, w2, b2)
    return out.reshape(B, 1)


# ----------------------------- synthetic encoder + params ---------------------------
# TODO(synk): the pretrained BERT/ELECTRA backbone has no clean Pallas equivalent here
# (it would need a checkpoint); it is replaced by a deterministic synthetic encoder that
# produces the per-layer hidden states consumed by the CEDR-KNRM head.
def synthetic_bert(params, token_ids, segments):
    emb = (params["tok_emb"][token_ids]
           + params["pos_emb"][None, :, :]
           + params["seg_emb"][segments])
    hidden_states = [emb]
    h = emb
    for l in range(NUM_BERT_LAYERS):
        h = jnp.tanh(h @ params["layer_w"][l] + params["layer_b"][l][None, None, :])
        hidden_states.append(h)
    hidden_stack = jnp.stack(hidden_states, axis=0)   # (NUM_BERT_LAYERS+1, B*P, L, H)
    return h, hidden_stack


def init_params(key):
    ks = jax.random.split(key, 8)
    p = {}
    p["tok_emb"] = jax.random.normal(ks[0], (VOCAB, HIDDEN), jnp.float32) * 0.5
    p["pos_emb"] = jax.random.normal(ks[1], (MAXSEQLEN, HIDDEN), jnp.float32) * 0.5
    p["seg_emb"] = jax.random.normal(ks[2], (2, HIDDEN), jnp.float32) * 0.5
    p["layer_w"] = jax.random.normal(ks[3], (NUM_BERT_LAYERS, HIDDEN, HIDDEN),
                                     jnp.float32) / math.sqrt(HIDDEN)
    p["layer_b"] = jax.random.normal(ks[4], (NUM_BERT_LAYERS, HIDDEN), jnp.float32) * 0.1
    stdv1 = 1.0 / math.sqrt(COMBINE_SIZE)
    p["w1"] = jax.random.uniform(ks[5], (COMBINE_SIZE, COMBINE_HIDDEN), jnp.float32, -stdv1, stdv1)
    p["b1"] = jax.random.uniform(ks[6], (1, COMBINE_HIDDEN), jnp.float32, -stdv1, stdv1)
    stdv2 = 1.0 / math.sqrt(COMBINE_HIDDEN)
    p["w2"] = jax.random.uniform(ks[7], (COMBINE_HIDDEN, 1), jnp.float32, -stdv2, stdv2)
    p["b2"] = jnp.zeros((1, 1), jnp.float32)
    return p


# ----------------------------- forward (wrapper around the kernel) ------------------
def cedr_knrm_forward(params, bert_input, bert_mask, bert_segments):
    B = bert_input.shape[0]
    P, L, Q, D, H = NUM_PASSAGES, MAXSEQLEN, MAXQLEN, MAXDOCLEN, HIDDEN
    tokens = bert_input.reshape(B * P, L)
    mask   = bert_mask.reshape(B * P, L).astype(jnp.float32)
    segs   = bert_segments.reshape(B * P, L)

    last_hidden, hidden_stack = synthetic_bert(params, tokens, segs)

    # CLS pooling over passages (tiny glue reduction, plain JAX), kept in f32
    cls = last_hidden[:, 0, :].reshape(B, P, H)
    cls_features = (jnp.mean(cls, axis=1) if CLS_MODE == "avg"
                    else jnp.max(cls, axis=1)).reshape(B, 1, H)

    # glue: strip [CLS], build masks in kernel-friendly layouts
    m, s = mask[:, 1:], segs[:, 1:]
    qm = (m * jnp.where(s == 0, 1.0, 0.0))[:, :Q]                 # (B*P, Q)
    dm = m * jnp.where(s == 1, 1.0, 0.0)                          # (B*P, D)
    qmask  = qm.reshape(B, P, Q, 1)                               # pre-exp per-passage mask (column)
    qmask0 = qm.reshape(B, P, Q)[:, 0, :].reshape(B, 1, Q)        # passage-0 mask (lane-major row)
    dmask  = dm.reshape(B, 1, P * D)                              # lane-major doc mask row

    # hidden-state stack stored in HBM as bf16; layer selection happens via the index_map
    emb = hidden_stack.reshape(hidden_stack.shape[0], B, P, L, H).astype(jnp.bfloat16)
    layer_ids = jnp.asarray(SIMMAT_LAYERS, jnp.int32)

    # RBF bank parameters as tiny broadcast-ready inputs (not captured kernel constants)
    mus_arr = jnp.asarray(MUS, jnp.float32).reshape(NUM_KERNELS, 1, 1)
    inv_arr = jnp.asarray(0.5 / (SIGMAS * SIGMAS), jnp.float32).reshape(NUM_KERNELS, 1, 1)

    # combine-MLP first-layer weights split by feature group (cls | per-layer KNRM feats)
    w1_cls  = params["w1"][:H]                                            # (H, CH)
    w1_knrm = params["w1"][H:].reshape(NUM_LAYERS, NUM_KERNELS, COMBINE_HIDDEN)

    return cedr_pallas(layer_ids, emb, qmask, qmask0, dmask, cls_features,
                       mus_arr, inv_arr, w1_cls, w1_knrm,
                       params["b1"], params["w2"], params["b2"])


# ----------------------------- pure-JAX reference (for validation) ------------------
def reference_forward(params, bert_input, bert_mask, bert_segments):
    B = bert_input.shape[0]
    P, L, Q, D, H = NUM_PASSAGES, MAXSEQLEN, MAXQLEN, MAXDOCLEN, HIDDEN
    tokens = bert_input.reshape(B * P, L)
    mask   = bert_mask.reshape(B * P, L).astype(jnp.float32)
    segs   = bert_segments.reshape(B * P, L)
    last_hidden, hidden_stack = synthetic_bert(params, tokens, segs)

    cls = last_hidden[:, 0, :].reshape(B, P, H)
    cls_features = jnp.mean(cls, axis=1) if CLS_MODE == "avg" else jnp.max(cls, axis=1)

    def cos_simmat(a, b, amask, bmask):
        a_den = jnp.sqrt(jnp.sum(a * a, axis=2))[:, :, None] + 1e-9
        b_den = jnp.sqrt(jnp.sum(b * b, axis=2))[:, None, :] + 1e-9
        res = jnp.einsum("bqh,bdh->bqd", a, b) / (a_den * b_den)
        return res * amask[:, :, None] * bmask[:, None, :]

    def knrm(emb):
        e, mm, ss = emb[:, 1:], mask[:, 1:], segs[:, 1:]
        qm = mm * jnp.where(ss == 0, 1.0, 0.0)
        pq = (qm[:, :, None] * e)[:, :Q]
        qm = qm[:, :Q]
        dm = mm * jnp.where(ss == 1, 1.0, 0.0)
        pd = dm[:, :, None] * e
        simmat = cos_simmat(pq, pd, qm, dm).reshape(B, P, Q, D)
        dmr = dm.reshape(B, P, 1, D)
        doc_simmat = jnp.concatenate([simmat[:, i] for i in range(P)], axis=2)   # (B, Q, P*D)
        doc_mask   = jnp.concatenate([dmr[:, i] for i in range(P)], axis=2)      # (B, 1, P*D)
        query_mask = qm.reshape(B, P, Q, 1)[:, 0]                                # (B, Q, 1)
        mus = jnp.asarray(MUS)[None, :, None, None]
        sig = jnp.asarray(SIGMAS)[None, :, None, None]
        pre = jnp.exp(-0.5 * (doc_simmat[:, None] - mus) ** 2 / (sig ** 2))      # (B, K, Q, P*D)
        pre = pre * doc_mask.reshape(B, 1, 1, -1) * query_mask.reshape(B, 1, -1, 1)
        feats = jnp.sum(pre, axis=3)
        feats = jnp.log(jnp.maximum(feats, 1e-10)) * 0.01
        return jnp.sum(feats, axis=2)

    layer_feats = [knrm(hidden_stack[l]) for l in SIMMAT_LAYERS]
    allf = jnp.concatenate([cls_features] + layer_feats, axis=1)
    return (allf @ params["w1"] + params["b1"]) @ params["w2"] + params["b2"]


# ----------------------------- main ---------------------------------------------------
if __name__ == "__main__":
    key = jax.random.PRNGKey(0)
    pkey, tkey = jax.random.split(key)
    params = init_params(pkey)

    bert_input = jax.random.randint(tkey, (BATCH, NUM_PASSAGES, MAXSEQLEN), 0, VOCAB,
                                    dtype=jnp.int32)
    positions = jnp.arange(MAXSEQLEN)
    seq_lens = jnp.array([[15, 13], [14, 11]], jnp.int32)   # [CLS]+query+[SEP]=6 tokens, rest doc
    bert_mask = (positions[None, None, :] < seq_lens[:, :, None]).astype(jnp.float32)
    bert_segments = jnp.broadcast_to(
        jnp.where(positions[None, None, :] >= (MAXQLEN_CFG + 2), 1, 0).astype(jnp.int32),
        (BATCH, NUM_PASSAGES, MAXSEQLEN))

    fwd = jax.jit(cedr_knrm_forward)
    score = jax.block_until_ready(fwd(params, bert_input, bert_mask, bert_segments))

    score_ref = jax.block_until_ready(
        reference_forward(params, bert_input, bert_mask, bert_segments))
    # tolerance accounts for bf16 HBM hidden states + bf16 MXU operands (elementwise math is f32)
    np.testing.assert_allclose(np.asarray(score), np.asarray(score_ref), rtol=5e-2, atol=2e-2)
    assert score.shape == (BATCH, 1) and bool(jnp.all(jnp.isfinite(score)))
    print("KERNEL_OK")
</pallas_src>

<mosaic_0001>
module attributes {stable_mosaic.version = 11 : i64} {
  func.func @_cedr_kernel(%arg0: i32, %arg1: i32, %arg2: memref<2xi32, #tpu.memory_space<smem>>, %arg3: memref<1x1x2x16x32xbf16, #tpu.memory_space<vmem>>, %arg4: memref<1x2x5x1xf32, #tpu.memory_space<vmem>>, %arg5: memref<1x1x5xf32, #tpu.memory_space<vmem>>, %arg6: memref<1x1x30xf32, #tpu.memory_space<vmem>>, %arg7: memref<1x1x32xf32, #tpu.memory_space<vmem>>, %arg8: memref<11x1x1xf32, #tpu.memory_space<vmem>>, %arg9: memref<11x1x1xf32, #tpu.memory_space<vmem>>, %arg10: memref<32x16xf32, #tpu.memory_space<vmem>>, %arg11: memref<1x11x16xf32, #tpu.memory_space<vmem>>, %arg12: memref<1x16xf32, #tpu.memory_space<vmem>>, %arg13: memref<16x1xf32, #tpu.memory_space<vmem>>, %arg14: memref<1x1xf32, #tpu.memory_space<vmem>>, %arg15: memref<1x1x1xf32, #tpu.memory_space<vmem>>, %arg16: memref<1x16xf32, #tpu.memory_space<vmem>>) attributes {dimension_semantics = [#tpu.dimension_semantics<parallel>, #tpu.dimension_semantics<arbitrary>], iteration_bounds = array<i64: 2, 2>, scalar_prefetch = 1 : i64, scratch_operands = 1 : i64, tpu.core_type = #tpu.core_type<tc>, window_params = [{transform_indices = @transform_0, window_bounds = array<i64: 1, 1, 2, 16, 32>}, {transform_indices = @transform_1, window_bounds = array<i64: 1, 2, 5, 1>}, {transform_indices = @transform_2, window_bounds = array<i64: 1, 1, 5>}, {transform_indices = @transform_3, window_bounds = array<i64: 1, 1, 30>}, {transform_indices = @transform_4, window_bounds = array<i64: 1, 1, 32>}, {pipeline_mode = #tpu.pipeline_mode<synchronous>, transform_indices = @transform_5, window_bounds = array<i64: 11, 1, 1>}, {pipeline_mode = #tpu.pipeline_mode<synchronous>, transform_indices = @transform_6, window_bounds = array<i64: 11, 1, 1>}, {pipeline_mode = #tpu.pipeline_mode<synchronous>, transform_indices = @transform_7, window_bounds = array<i64: 32, 16>}, {transform_indices = @transform_8, window_bounds = array<i64: 1, 11, 16>}, {pipeline_mode = #tpu.pipeline_mode<synchronous>, transform_indices = @transform_9, window_bounds = array<i64: 1, 16>}, {pipeline_mode = #tpu.pipeline_mode<synchronous>, transform_indices = @transform_10, window_bounds = array<i64: 16, 1>}, {pipeline_mode = #tpu.pipeline_mode<synchronous>, transform_indices = @transform_11, window_bounds = array<i64: 1, 1>}, {transform_indices = @transform_12, window_bounds = array<i64: 1, 1, 1>}]} {
    %c0_i32 = arith.constant 0 : i32
    %0 = arith.cmpi eq, %arg1, %c0_i32 : i32
    %1 = arith.extui %0 : i1 to i32
    %c0_i32_0 = arith.constant 0 : i32
    %2 = arith.cmpi ne, %1, %c0_i32_0 : i32
    scf.if %2 {
      %c0_48 = arith.constant 0 : index
      %c0_49 = arith.constant 0 : index
      %c0_50 = arith.constant 0 : index
      %85 = vector.load %arg7[%c0_48, %c0_49, %c0_50] : memref<1x1x32xf32, #tpu.memory_space<vmem>>, vector<1x1x32xf32>
      %86 = vector.shape_cast %85 : vector<1x1x32xf32> to vector<1x32xf32>
      %c0_51 = arith.constant 0 : index
      %c0_52 = arith.constant 0 : index
      %87 = vector.load %arg10[%c0_51, %c0_52] : memref<32x16xf32, #tpu.memory_space<vmem>>, vector<32x16xf32>
      %cst_53 = arith.constant dense<0.000000e+00> : vector<1x16xf32>
      %88 = tpu.matmul %86, %87, %cst_53 {dimension_numbers = #tpu.dot_dimension_numbers<[1], [0], [0], [1], [0, 0, 1, 1], [], []>} : vector<1x32xf32>, vector<32x16xf32>, vector<1x16xf32> -> vector<1x16xf32>
      %c0_54 = arith.constant 0 : index
      %c0_55 = arith.constant 0 : index
      %89 = vector.load %arg12[%c0_54, %c0_55] : memref<1x16xf32, #tpu.memory_space<vmem>>, vector<1x16xf32>
      %90 = arith.addf %88, %89 : vector<1x16xf32>
      %c0_56 = arith.constant 0 : index
      %c0_57 = arith.constant 0 : index
      %91 = vector.load %arg16[%c0_56, %c0_57] : memref<1x16xf32, #tpu.memory_space<vmem>>, vector<1x16xf32>
      tpu.vector_store %arg16[%c0_56, %c0_57], %90 {strides = array<i32>} : memref<1x16xf32, #tpu.memory_space<vmem>>, vector<1x16xf32>,
    } else {
    }
    %c0 = arith.constant 0 : index
    %c0_1 = arith.constant 0 : index
    %c0_2 = arith.constant 0 : index
    %c0_3 = arith.constant 0 : index
    %c0_4 = arith.constant 0 : index
    %3 = vector.load %arg3[%c0, %c0_1, %c0_2, %c0_3, %c0_4] : memref<1x1x2x16x32xbf16, #tpu.memory_space<vmem>>, vector<1x1x1x16x32xbf16>
    %4 = vector.shape_cast %3 : vector<1x1x1x16x32xbf16> to vector<16x32xbf16>
    %5 = arith.extf %4 : vector<16x32xbf16> to vector<16x32xf32>
    %6 = vector.extract_strided_slice %5 {offsets = [1, 0], sizes = [15, 32], strides = [1, 1]} : vector<16x32xf32> to vector<15x32xf32>
    %7 = arith.mulf %6, %6 : vector<15x32xf32>
    %cst = arith.constant dense<0.000000e+00> : vector<15xf32>
    %8 = vector.multi_reduction <add>, %7, %cst [1] : vector<15x32xf32> to vector<15xf32>
    %9 = vector.shape_cast %8 : vector<15xf32> to vector<15x1xf32>
    %cst_5 = arith.constant 9.99999996E-13 : f32
    %10 = vector.broadcast %cst_5 : f32 to vector<15x1xf32>
    %11 = arith.addf %9, %10 : vector<15x1xf32>
    %12 = math.rsqrt %11 : vector<15x1xf32>
    %13 = vector.broadcast %12 : vector<15x1xf32> to vector<15x32xf32>
    %14 = arith.mulf %6, %13 : vector<15x32xf32>
    %15 = vector.extract_strided_slice %14 {offsets = [0, 0], sizes = [5, 32], strides = [1, 1]} : vector<15x32xf32> to vector<5x32xf32>
    %c0_6 = arith.constant 0 : index
    %c0_7 = arith.constant 0 : index
    %c0_8 = arith.constant 0 : index
    %c0_9 = arith.constant 0 : index
    %16 = vector.load %arg4[%c0_6, %c0_7, %c0_8, %c0_9] : memref<1x2x5x1xf32, #tpu.memory_space<vmem>>, vector<1x1x5x1xf32>
    %17 = vector.shape_cast %16 : vector<1x1x5x1xf32> to vector<5x1xf32>
    %18 = vector.broadcast %17 : vector<5x1xf32> to vector<5x32xf32>
    %19 = arith.mulf %15, %18 : vector<5x32xf32>
    %20 = arith.truncf %19 : vector<5x32xf32> to vector<5x32xbf16>
    %21 = arith.truncf %14 : vector<15x32xf32> to vector<15x32xbf16>
    %cst_10 = arith.constant dense<0.000000e+00> : vector<5x15xf32>
    %22 = tpu.matmul %20, %21, %cst_10 {dimension_numbers = #tpu.dot_dimension_numbers<[1], [1], [0], [0], [0, 0, 1, 0], [], []>} : vector<5x32xbf16>, vector<15x32xbf16>, vector<5x15xf32> -> vector<5x15xf32>
    %c0_11 = arith.constant 0 : index
    %c0_12 = arith.constant 0 : index
    %c1 = arith.constant 1 : index
    %c0_13 = arith.constant 0 : index
    %c0_14 = arith.constant 0 : index
    %23 = vector.load %arg3[%c0_11, %c0_12, %c1, %c0_13, %c0_14] : memref<1x1x2x16x32xbf16, #tpu.memory_space<vmem>>, vector<1x1x1x16x32xbf16>
    %24 = vector.shape_cast %23 : vector<1x1x1x16x32xbf16> to vector<16x32xbf16>
    %25 = arith.extf %24 : vector<16x32xbf16> to vector<16x32xf32>
    %26 = vector.extract_strided_slice %25 {offsets = [1, 0], sizes = [15, 32], strides = [1, 1]} : vector<16x32xf32> to vector<15x32xf32>
    %27 = arith.mulf %26, %26 : vector<15x32xf32>
    %cst_15 = arith.constant dense<0.000000e+00> : vector<15xf32>
    %28 = vector.multi_reduction <add>, %27, %cst_15 [1] : vector<15x32xf32> to vector<15xf32>
    %29 = vector.shape_cast %28 : vector<15xf32> to vector<15x1xf32>
    %cst_16 = arith.constant 9.99999996E-13 : f32
    %30 = vector.broadcast %cst_16 : f32 to vector<15x1xf32>
    %31 = arith.addf %29, %30 : vector<15x1xf32>
    %32 = math.rsqrt %31 : vector<15x1xf32>
    %33 = vector.broadcast %32 : vector<15x1xf32> to vector<15x32xf32>
    %34 = arith.mulf %26, %33 : vector<15x32xf32>
    %35 = vector.extract_strided_slice %34 {offsets = [0, 0], sizes = [5, 32], strides = [1, 1]} : vector<15x32xf32> to vector<5x32xf32>
    %c0_17 = arith.constant 0 : index
    %c1_18 = arith.constant 1 : index
    %c0_19 = arith.constant 0 : index
    %c0_20 = arith.constant 0 : index
    %36 = vector.load %arg4[%c0_17, %c1_18, %c0_19, %c0_20] : memref<1x2x5x1xf32, #tpu.memory_space<vmem>>, vector<1x1x5x1xf32>
    %37 = vector.shape_cast %36 : vector<1x1x5x1xf32> to vector<5x1xf32>
    %38 = vector.broadcast %37 : vector<5x1xf32> to vector<5x32xf32>
    %39 = arith.mulf %35, %38 : vector<5x32xf32>
    %40 = arith.truncf %39 : vector<5x32xf32> to vector<5x32xbf16>
    %41 = arith.truncf %34 : vector<15x32xf32> to vector<15x32xbf16>
    %cst_21 = arith.constant dense<0.000000e+00> : vector<5x15xf32>
    %42 = tpu.matmul %40, %41, %cst_21 {dimension_numbers = #tpu.dot_dimension_numbers<[1], [1], [0], [0], [0, 0, 1, 0], [], []>} : vector<5x32xbf16>, vector<15x32xbf16>, vector<5x15xf32> -> vector<5x15xf32>
    %43 = tpu.concatenate %22, %42 in 1 : vector<5x15xf32>, vector<5x15xf32> -> vector<5x30xf32>
    %44 = vector.shape_cast %43 : vector<5x30xf32> to vector<1x5x30xf32>
    %c0_22 = arith.constant 0 : index
    %c0_23 = arith.constant 0 : index
    %c0_24 = arith.constant 0 : index
    %45 = vector.load %arg8[%c0_22, %c0_23, %c0_24] : memref<11x1x1xf32, #tpu.memory_space<vmem>>, vector<11x1x1xf32>
    %46 = vector.broadcast %44 : vector<1x5x30xf32> to vector<11x5x30xf32>
    %47 = vector.broadcast %45 : vector<11x1x1xf32> to vector<11x5x30xf32>
    %48 = arith.subf %46, %47 : vector<11x5x30xf32>
    %49 = arith.mulf %48, %48 : vector<11x5x30xf32>
    %cst_25 = arith.constant 0.000000e+00 : f32
    %50 = vector.broadcast %cst_25 : f32 to vector<11x5x30xf32>
    %51 = arith.subf %50, %49 : vector<11x5x30xf32>
    %c0_26 = arith.constant 0 : index
    %c0_27 = arith.constant 0 : index
    %c0_28 = arith.constant 0 : index
    %52 = vector.load %arg9[%c0_26, %c0_27, %c0_28] : memref<11x1x1xf32, #tpu.memory_space<vmem>>, vector<11x1x1xf32>
    %53 = vector.broadcast %52 : vector<11x1x1xf32> to vector<11x5x30xf32>
    %54 = arith.mulf %51, %53 : vector<11x5x30xf32>
    %55 = math.exp %54 : vector<11x5x30xf32>
    %c0_29 = arith.constant 0 : index
    %c0_30 = arith.constant 0 : index
    %c0_31 = arith.constant 0 : index
    %56 = vector.load %arg6[%c0_29, %c0_30, %c0_31] : memref<1x1x30xf32, #tpu.memory_space<vmem>>, vector<1x1x30xf32>
    %57 = vector.shape_cast %56 : vector<1x1x30xf32> to vector<1x30xf32>
    %58 = vector.shape_cast %57 : vector<1x30xf32> to vector<1x1x30xf32>
    %59 = vector.broadcast %58 : vector<1x1x30xf32> to vector<11x5x30xf32>
    %60 = arith.mulf %55, %59 : vector<11x5x30xf32>
    %cst_32 = arith.constant dense<0.000000e+00> : vector<11x5xf32>
    %61 = vector.multi_reduction <add>, %60, %cst_32 [2] : vector<11x5x30xf32> to vector<11x5xf32>
    %c0_33 = arith.constant 0 : index
    %c0_34 = arith.constant 0 : index
    %c0_35 = arith.constant 0 : index
    %62 = vector.load %arg5[%c0_33, %c0_34, %c0_35] : memref<1x1x5xf32, #tpu.memory_space<vmem>>, vector<1x1x5xf32>
    %63 = vector.shape_cast %62 : vector<1x1x5xf32> to vector<1x5xf32>
    %64 = vector.broadcast %63 : vector<1x5xf32> to vector<11x5xf32>
    %65 = arith.mulf %61, %64 : vector<11x5xf32>
    %cst_36 = arith.constant 1.000000e-10 : f32
    %66 = vector.broadcast %cst_36 : f32 to vector<11x5xf32>
    %67 = arith.maximumf %65, %66 : vector<11x5xf32>
    %68 = math.log %67 : vector<11x5xf32>
    %cst_37 = arith.constant 0.00999999977 : f32
    %69 = vector.broadcast %cst_37 : f32 to vector<11x5xf32>
    %70 = arith.mulf %68, %69 : vector<11x5xf32>
    %cst_38 = arith.constant dense<0.000000e+00> : vector<11xf32>
    %71 = vector.multi_reduction <add>, %70, %cst_38 [1] : vector<11x5xf32> to vector<11xf32>
    %72 = vector.shape_cast %71 : vector<11xf32> to vector<11x1xf32>
    %c0_39 = arith.constant 0 : index
    %c0_40 = arith.constant 0 : index
    %73 = vector.load %arg16[%c0_39, %c0_40] : memref<1x16xf32, #tpu.memory_space<vmem>>, vector<1x16xf32>
    %c0_41 = arith.constant 0 : index
    %c0_42 = arith.constant 0 : index
    %c0_43 = arith.constant 0 : index
    %74 = vector.load %arg11[%c0_41, %c0_42, %c0_43] : memref<1x11x16xf32, #tpu.memory_space<vmem>>, vector<1x11x16xf32>
    %75 = vector.shape_cast %74 : vector<1x11x16xf32> to vector<11x16xf32>
    %76 = vector.broadcast %72 : vector<11x1xf32> to vector<11x16xf32>
    %77 = arith.mulf %76, %75 : vector<11x16xf32>
    %cst_44 = arith.constant dense<0.000000e+00> : vector<16xf32>
    %78 = vector.multi_reduction <add>, %77, %cst_44 [0] : vector<11x16xf32> to vector<16xf32>
    %79 = vector.shape_cast %78 : vector<16xf32> to vector<1x16xf32>
    %80 = arith.addf %73, %79 : vector<1x16xf32>
    %c0_45 = arith.constant 0 : index
    %c0_46 = arith.constant 0 : index
    %81 = vector.load %arg16[%c0_45, %c0_46] : memref<1x16xf32, #tpu.memory_space<vmem>>, vector<1x16xf32>
    tpu.vector_store %arg16[%c0_45, %c0_46], %80 {strides = array<i32>} : memref<1x16xf32, #tpu.memory_space<vmem>>, vector<1x16xf32>,
    %c1_i32 = arith.constant 1 : i32
    %82 = arith.cmpi eq, %arg1, %c1_i32 : i32
    %83 = arith.extui %82 : i1 to i32
    %c0_i32_47 = arith.constant 0 : i32
    %84 = arith.cmpi ne, %83, %c0_i32_47 : i32
    scf.if %84 {
      %c0_48 = arith.constant 0 : index
      %c0_49 = arith.constant 0 : index
      %85 = vector.load %arg16[%c0_48, %c0_49] : memref<1x16xf32, #tpu.memory_space<vmem>>, vector<1x16xf32>
      %c0_50 = arith.constant 0 : index
      %c0_51 = arith.constant 0 : index
      %86 = vector.load %arg13[%c0_50, %c0_51] : memref<16x1xf32, #tpu.memory_space<vmem>>, vector<16x1xf32>
      %cst_52 = arith.constant dense<0.000000e+00> : vector<1x1xf32>
      %87 = tpu.matmul %85, %86, %cst_52 {dimension_numbers = #tpu.dot_dimension_numbers<[1], [0], [0], [1], [0, 0, 1, 1], [], []>} : vector<1x16xf32>, vector<16x1xf32>, vector<1x1xf32> -> vector<1x1xf32>
      %c0_53 = arith.constant 0 : index
      %c0_54 = arith.constant 0 : index
      %88 = vector.load %arg14[%c0_53, %c0_54] : memref<1x1xf32, #tpu.memory_space<vmem>>, vector<1x1xf32>
      %89 = arith.addf %87, %88 : vector<1x1xf32>
      %c0_55 = arith.constant 0 : index
      %c0_56 = arith.constant 0 : index
      %c0_57 = arith.constant 0 : index
      %90 = vector.load %arg15[%c0_55, %c0_56, %c0_57] : memref<1x1x1xf32, #tpu.memory_space<vmem>>, vector<1x1x1xf32>
      %91 = vector.shape_cast %90 : vector<1x1x1xf32> to vector<1x1xf32>
      %92 = vector.shape_cast %89 : vector<1x1xf32> to vector<1x1x1xf32>
      tpu.vector_store %arg15[%c0_55, %c0_56, %c0_57], %92 {strides = array<i32>} : memref<1x1x1xf32, #tpu.memory_space<vmem>>, vector<1x1x1xf32>,
    } else {
    }
    return
  }
  func.func @transform_0(%arg0: i32, %arg1: i32, %arg2: memref<2xi32, #tpu.memory_space<smem>>) -> (i32, i32, i32, i32, i32) {
    %0 = arith.index_cast %arg1 : i32 to index
    %1 = memref.load %arg2[%0] : memref<2xi32, #tpu.memory_space<smem>>
    %c0_i32 = arith.constant 0 : i32
    %c0_i32_0 = arith.constant 0 : i32
    %c0_i32_1 = arith.constant 0 : i32
    %c0_i32_2 = arith.constant 0 : i32
    return %1, %arg0, %c0_i32, %c0_i32_0, %c0_i32_1 : i32, i32, i32, i32, i32
  }
  func.func @transform_1(%arg0: i32, %arg1: i32, %arg2: memref<2xi32, #tpu.memory_space<smem>>) -> (i32, i32, i32, i32) {
    %c0_i32 = arith.constant 0 : i32
    %c0_i32_0 = arith.constant 0 : i32
    %c0_i32_1 = arith.constant 0 : i32
    %c0_i32_2 = arith.constant 0 : i32
    return %arg0, %c0_i32, %c0_i32_0, %c0_i32_1 : i32, i32, i32, i32
  }
  func.func @transform_2(%arg0: i32, %arg1: i32, %arg2: memref<2xi32, #tpu.memory_space<smem>>) -> (i32, i32, i32) {
    %c0_i32 = arith.constant 0 : i32
    %c0_i32_0 = arith.constant 0 : i32
    %c0_i32_1 = arith.constant 0 : i32
    return %arg0, %c0_i32, %c0_i32_0 : i32, i32, i32
  }
  func.func @transform_3(%arg0: i32, %arg1: i32, %arg2: memref<2xi32, #tpu.memory_space<smem>>) -> (i32, i32, i32) {
    %c0_i32 = arith.constant 0 : i32
    %c0_i32_0 = arith.constant 0 : i32
    %c0_i32_1 = arith.constant 0 : i32
    return %arg0, %c0_i32, %c0_i32_0 : i32, i32, i32
  }
  func.func @transform_4(%arg0: i32, %arg1: i32, %arg2: memref<2xi32, #tpu.memory_space<smem>>) -> (i32, i32, i32) {
    %c0_i32 = arith.constant 0 : i32
    %c0_i32_0 = arith.constant 0 : i32
    %c0_i32_1 = arith.constant 0 : i32
    return %arg0, %c0_i32, %c0_i32_0 : i32, i32, i32
  }
  func.func @transform_5(%arg0: i32, %arg1: i32, %arg2: memref<2xi32, #tpu.memory_space<smem>>) -> (i32, i32, i32) {
    %c0_i32 = arith.constant 0 : i32
    %c0_i32_0 = arith.constant 0 : i32
    %c0_i32_1 = arith.constant 0 : i32
    %c0_i32_2 = arith.constant 0 : i32
    return %c0_i32, %c0_i32_0, %c0_i32_1 : i32, i32, i32
  }
  func.func @transform_6(%arg0: i32, %arg1: i32, %arg2: memref<2xi32, #tpu.memory_space<smem>>) -> (i32, i32, i32) {
    %c0_i32 = arith.constant 0 : i32
    %c0_i32_0 = arith.constant 0 : i32
    %c0_i32_1 = arith.constant 0 : i32
    %c0_i32_2 = arith.constant 0 : i32
    return %c0_i32, %c0_i32_0, %c0_i32_1 : i32, i32, i32
  }
  func.func @transform_7(%arg0: i32, %arg1: i32, %arg2: memref<2xi32, #tpu.memory_space<smem>>) -> (i32, i32) {
    %c0_i32 = arith.constant 0 : i32
    %c0_i32_0 = arith.constant 0 : i32
    %c0_i32_1 = arith.constant 0 : i32
    return %c0_i32, %c0_i32_0 : i32, i32
  }
  func.func @transform_8(%arg0: i32, %arg1: i32, %arg2: memref<2xi32, #tpu.memory_space<smem>>) -> (i32, i32, i32) {
    %c0_i32 = arith.constant 0 : i32
    %c0_i32_0 = arith.constant 0 : i32
    %c0_i32_1 = arith.constant 0 : i32
    return %arg1, %c0_i32, %c0_i32_0 : i32, i32, i32
  }
  func.func @transform_9(%arg0: i32, %arg1: i32, %arg2: memref<2xi32, #tpu.memory_space<smem>>) -> (i32, i32) {
    %c0_i32 = arith.constant 0 : i32
    %c0_i32_0 = arith.constant 0 : i32
    %c0_i32_1 = arith.constant 0 : i32
    return %c0_i32, %c0_i32_0 : i32, i32
  }
  func.func @transform_10(%arg0: i32, %arg1: i32, %arg2: memref<2xi32, #tpu.memory_space<smem>>) -> (i32, i32) {
    %c0_i32 = arith.constant 0 : i32
    %c0_i32_0 = arith.constant 0 : i32
    %c0_i32_1 = arith.constant 0 : i32
    return %c0_i32, %c0_i32_0 : i32, i32
  }
  func.func @transform_11(%arg0: i32, %arg1: i32, %arg2: memref<2xi32, #tpu.memory_space<smem>>) -> (i32, i32) {
    %c0_i32 = arith.constant 0 : i32
    %c0_i32_0 = arith.constant 0 : i32
    %c0_i32_1 = arith.constant 0 : i32
    return %c0_i32, %c0_i32_0 : i32, i32
  }
  func.func @transform_12(%arg0: i32, %arg1: i32, %arg2: memref<2xi32, #tpu.memory_space<smem>>) -> (i32, i32, i32) {
    %c0_i32 = arith.constant 0 : i32
    %c0_i32_0 = arith.constant 0 : i32
    %c0_i32_1 = arith.constant 0 : i32
    return %arg0, %c0_i32, %c0_i32_0 : i32, i32, i32
  }
}

</mosaic_0001>

<llo_original>
// kernel: cedr_knrm_forward.1
$region0: #{cedr_knrm_forward.1}
  #allocation0 [shape = 'u32[]', space=smem, size = 0x4, offset = 0x4, fixed_abs, tag = 'smem constant byte address 0x4 - core index']
  #allocation1 [shape = 'u32[144,128]{1,0:T(1,128)}', space=vmem, size = 0x12000, scoped, tag = 'internal scratch']
  #allocation2 [shape = 'f32[1,16]{1,0:T(1,128)}', space=vmem, size = 0x200, scoped, tag = 'scratch operand']
  #allocation3 [shape = 's32[1]{0}', space=sflag, size = 0x4, scoped, tag = 'scoped memory for cedr_knrm_forward.1']
  #allocation4 [shape = 'u8[512]{0}', space=smem, size = 0x200, scoped, tag = 'prefetched SMEM operand 0']
  #allocation5 [shape = 'f32[1,1]{1,0:T(1,128)S(1)}', space=vmem, size = 0x200, scoped, tag = 'scoped memory for cedr_knrm_forward.1']
  %s0 = inlined_call_operand.hbm [shape: s32[2], index: 0, kind: input, shape index: {}]
  %s1 = inlined_call_operand.hbm [shape: bf16[4,2,2,16,32], index: 1, kind: input, shape index: {}]
  %s2 = inlined_call_operand.hbm [shape: f32[2,2,5,1], index: 2, kind: input, shape index: {}]
  %s3 = inlined_call_operand.hbm [shape: f32[2,1,5], index: 3, kind: input, shape index: {}]
  %s4 = inlined_call_operand.hbm [shape: f32[2,1,30], index: 4, kind: input, shape index: {}]
  %s5 = inlined_call_operand.hbm [shape: f32[2,1,32], index: 5, kind: input, shape index: {}]
  %s6 = inlined_call_operand.hbm [shape: f32[11,1,1], index: 6, kind: input, shape index: {}]
  %s7 = inlined_call_operand.hbm [shape: f32[11,1,1], index: 7, kind: input, shape index: {}]
  %s8 = inlined_call_operand.hbm [shape: f32[32,16], index: 8, kind: input, shape index: {}]
  %s9 = inlined_call_operand.hbm [shape: f32[2,11,16], index: 9, kind: input, shape index: {}]
  %s10 = inlined_call_operand.hbm [shape: f32[1,16], index: 10, kind: input, shape index: {}]
  %s11 = inlined_call_operand.hbm [shape: f32[16,1], index: 11, kind: input, shape index: {}]
  %s12 = inlined_call_operand.<no memory space> [shape: f32[1,1], index: 12, kind: input, shape index: {}]
  %s13 = inlined_call_operand.hbm [shape: f32[2,1,1], index: 13, kind: output, shape index: {}]
  %s14 = sld [smem:[#allocation0]]
  $region133: #{cedr_knrm_forward.1} parent=0
    _
  %s16 = ssub.s32 1, %s14
  %s17 = scalar_select 0, %s16, %s14
  %19 = dma.hbm_to_smem %s0, 16, [#allocation4], [#allocation3]
  %v20 = vstv %s12
  %21 = vst [vmem:[#allocation5] sm:$0x1] %v20
  %22 = dma.done [#allocation3], 16
  %23 = sfence
  $region1: #{cedr_knrm_forward.1} parent=0
    #allocation6 [shape = 'u8[16384]{0}', space=vmem, size = 0x4000, scoped, tag = 'input window, operand 1']
    #allocation7 [shape = 's32[2]{0}', space=sflag, size = 0x8, scoped, tag = 'scoped memory for cedr_knrm_forward.1']
    #allocation8 [shape = 's32[2]{0}', space=sflag, size = 0x8, scoped, tag = 'scoped memory for cedr_knrm_forward.1']
    #allocation9 [shape = 'u8[16384]{0}', space=vmem, size = 0x4000, scoped, tag = 'input window, operand 2']
    #allocation10 [shape = 's32[2]{0}', space=sflag, size = 0x8, scoped, tag = 'scoped memory for cedr_knrm_forward.1']
    #allocation11 [shape = 'u8[1024]{0}', space=vmem, size = 0x400, scoped, tag = 'input window, operand 3']
    #allocation12 [shape = 'u8[1024]{0}', space=vmem, size = 0x400, scoped, tag = 'input window, operand 4']
    #allocation13 [shape = 's32[2]{0}', space=sflag, size = 0x8, scoped, tag = 'scoped memory for cedr_knrm_forward.1']
    #allocation14 [shape = 'u8[1024]{0}', space=vmem, size = 0x400, scoped, tag = 'input window, operand 5']
    #allocation15 [shape = 'u8[5632]{0}', space=vmem, size = 0x1800, scoped, tag = 'input window, operand 6, single buffered']
    #allocation16 [shape = 's32[1]{0}', space=sflag, size = 0x4, scoped, tag = 'scoped memory for cedr_knrm_forward.1']
    #allocation17 [shape = 'u8[5632]{0}', space=vmem, size = 0x1800, scoped, tag = 'input window, operand 7, single buffered']
    #allocation18 [shape = 'u8[16384]{0}', space=vmem, size = 0x4000, scoped, tag = 'input window, operand 8, single buffered']
    #allocation19 [shape = 's32[1]{0}', space=sflag, size = 0x4, scoped, tag = 'scoped memory for cedr_knrm_forward.1']
    #allocation20 [shape = 'u8[16384]{0}', space=vmem, size = 0x4000, scoped, tag = 'input window, operand 9']
    #allocation21 [shape = 'u8[512]{0}', space=vmem, size = 0x400, scoped, tag = 'input window, operand 10, single buffered']
    #allocation22 [shape = 'u8[8192]{0}', space=vmem, size = 0x2000, scoped, tag = 'input window, operand 11, single buffered']
    #allocation23 [shape = 'u8[1024]{0}', space=vmem, size = 0x400, scoped, tag = 'output window, operand 0']
    %24 = vsyncpa [#allocation7], 0
    %s25 = scalar_lea.sflag [#allocation7], 1
    %26 = vsyncpa %s25, 0
    %27 = vsyncpa [#allocation10], 0
    %s28 = scalar_lea.sflag [#allocation10], 1
    %29 = vsyncpa %s28, 0
    %30 = vsyncpa [#allocation13], 0
    %s31 = scalar_lea.sflag [#allocation13], 1
    %32 = vsyncpa %s31, 0
    %33 = vsyncpa [#allocation16], 0
    %34 = vsyncpa [#allocation19], 0
    %35 = vsyncpa [#allocation8], 0
    %s36 = scalar_lea.sflag [#allocation8], 1
    %37 = vsyncpa %s36, 0
    loop: start=0, step=1, limit=6
    $region2: #{cedr_knrm_forward.1} parent=1 // loop_pre_header
      _
    $region3: #{cedr_knrm_forward.1} parent=1 // loop_header
      %s39 = sphi 0, %s43
      %p40 = scmp.ge.s32.totalorder %s39, 6
      %s46 = sphi 0, %s58
      %s47 = sphi 0, %s54
      %s48 = sphi 0, %s46
      %s49 = sphi 0, %s47
      %s50 = sphi 0, %s48
      %s51 = sphi 0, %s49
      %s65 = sphi 0, %s67
      %s68 = sphi 0, %s65
      %s69 = sphi 0, %s68
      %s85 = sphi 0, %s69
      %s91 = sphi 0, %s93
      %s94 = sphi 0, %s91
      %s95 = sphi 0, %s94
      %s111 = sphi 0, %s95
      %s117 = sphi 0, %s119
      %s120 = sphi 0, %s117
      %s121 = sphi 0, %s120
      %s137 = sphi 0, %s121
      %s143 = sphi 0, %s145
      %s146 = sphi 0, %s143
      %s147 = sphi 0, %s146
      %s163 = sphi 0, %s147
      %s169 = sphi 0, %s171
      %s172 = sphi 0, %s169
      %s173 = sphi 0, %s172
      %s189 = sphi 0, %s173
      %s193 = sphi 0, %s193
      %s195 = sphi 0, %s193
      %s196 = sphi 0, %s195
      %s210 = sphi 0, %s196
      %s214 = sphi 0, %s214
      %s216 = sphi 0, %s214
      %s217 = sphi 0, %s216
      %s231 = sphi 0, %s217
      %s235 = sphi 0, %s235
      %s237 = sphi 0, %s235
      %s238 = sphi 0, %s237
      %s252 = sphi 0, %s238
      %s258 = sphi 0, %s260
      %s261 = sphi 0, %s258
      %s262 = sphi 0, %s261
      %s278 = sphi 0, %s262
      %s282 = sphi 0, %s282
      %s284 = sphi 0, %s282
      %s285 = sphi 0, %s284
      %s299 = sphi 0, %s285
      %s303 = sphi 0, %s303
      %s305 = sphi 0, %s303
      %s306 = sphi 0, %s305
      %s320 = sphi 0, %s306
      %s324 = sphi 0, %s324
      %s326 = sphi 0, %s324
      %s327 = sphi 0, %s326
      %s341 = sphi 0, %s327
      %s347 = sphi 0, %s349
      %s350 = sphi 0, %s347
      %s351 = sphi 0, %s350
      %s367 = sphi 0, %s351
    $region4: #{cedr_knrm_forward.1} parent=1 // loop_header_branch
      %42 = sbr.rel (%p40) target = $region8
    $region5: #{cedr_knrm_forward.1} parent=1 // loop_body
      %s44 = ssub.s32 %s39, 1
      %s45 = ssub.s32 %s39, 2
      %s52 = sadd.s32 1, %s47
      %p53 = scmp.ge.s32.totalorder %s52, 2
      %s54 = scalar_select %p53, 0, %s52
      %s55 = sadd.s32 1, %s46
      %s56 = scalar_select %p53, %s55, %s46
      %p57 = scmp.ge.s32.totalorder %s56, 2
      %s58 = scalar_select %p57, 0, %s56
      %s59 = sld [smem:[#allocation4 + %s47]]
      %s60 = sld [smem:[#allocation4 + %s54]]
      %s61 = ssub.s32 %s59, %s60
      %s62 = ssub.s32 %s46, %s58
      %s63 = sor.u32 %s61, %s62
      %p64 = scmp.eq.s32.totalorder %s63, 0
      %s66 = sadd.s32 %s65, 1
      %s67 = scalar_select %p64, %s65, %s66
      %p70 = pneg %p64
      %p71 = scmp.eq.s32.totalorder %s39, 3
      %p72 = por %p70, %p71
      %p73 = scmp.ne.s32.totalorder %s65, %s68
      %p74 = scmp.eq.s32.totalorder %s39, 0
      %p75 = por %p73, %p74
      %p76 = scmp.ne.s32.totalorder %s65, %s68
      %p77 = scmp.eq.s32.totalorder %s44, 3
      %p78 = por %p76, %p77
      %p79 = scmp.ne.s32.totalorder %s68, %s69
      %p80 = scmp.eq.s32.totalorder %s44, 0
      %p81 = por %p79, %p80
      %p82 = scmp.ne.s32.totalorder %s68, %s69
      %p83 = scmp.eq.s32.totalorder %s45, 3
      %p84 = por %p82, %p83
      %p86 = scmp.ne.s32.totalorder %s69, %s85
      %p87 = scmp.eq.s32.totalorder %s45, 0
      %p88 = por %p86, %p87
      %s89 = ssub.s32 %s46, %s58
      %p90 = scmp.eq.s32.totalorder %s89, 0
      %s92 = sadd.s32 %s91, 1
      %s93 = scalar_select %p90, %s91, %s92
      %p96 = pneg %p90
      %p97 = scmp.eq.s32.totalorder %s39, 3
      %p98 = por %p96, %p97
      %p99 = scmp.ne.s32.totalorder %s91, %s94
      %p100 = scmp.eq.s32.totalorder %s39, 0
      %p101 = por %p99, %p100
      %p102 = scmp.ne.s32.totalorder %s91, %s94
      %p103 = scmp.eq.s32.totalorder %s44, 3
      %p104 = por %p102, %p103
      %p105 = scmp.ne.s32.totalorder %s94, %s95
      %p106 = scmp.eq.s32.totalorder %s44, 0
      %p107 = por %p105, %p106
      %p108 = scmp.ne.s32.totalorder %s94, %s95
      %p109 = scmp.eq.s32.totalorder %s45, 3
      %p110 = por %p108, %p109
      %p112 = scmp.ne.s32.totalorder %s95, %s111
      %p113 = scmp.eq.s32.totalorder %s45, 0
      %p114 = por %p112, %p113
      %s115 = ssub.s32 %s46, %s58
      %p116 = scmp.eq.s32.totalorder %s115, 0
      %s118 = sadd.s32 %s117, 1
      %s119 = scalar_select %p116, %s117, %s118
      %p122 = pneg %p116
      %p123 = scmp.eq.s32.totalorder %s39, 3
      %p124 = por %p122, %p123
      %p125 = scmp.ne.s32.totalorder %s117, %s120
      %p126 = scmp.eq.s32.totalorder %s39, 0
      %p127 = por %p125, %p126
      %p128 = scmp.ne.s32.totalorder %s117, %s120
      %p129 = scmp.eq.s32.totalorder %s44, 3
      %p130 = por %p128, %p129
      %p131 = scmp.ne.s32.totalorder %s120, %s121
      %p132 = scmp.eq.s32.totalorder %s44, 0
      %p133 = por %p131, %p132
      %p134 = scmp.ne.s32.totalorder %s120, %s121
      %p135 = scmp.eq.s32.totalorder %s45, 3
      %p136 = por %p134, %p135
      %p138 = scmp.ne.s32.totalorder %s121, %s137
      %p139 = scmp.eq.s32.totalorder %s45, 0
      %p140 = por %p138, %p139
      %s141 = ssub.s32 %s46, %s58
      %p142 = scmp.eq.s32.totalorder %s141, 0
      %s144 = sadd.s32 %s143, 1
      %s145 = scalar_select %p142, %s143, %s144
      %p148 = pneg %p142
      %p149 = scmp.eq.s32.totalorder %s39, 3
      %p150 = por %p148, %p149
      %p151 = scmp.ne.s32.totalorder %s143, %s146
      %p152 = scmp.eq.s32.totalorder %s39, 0
      %p153 = por %p151, %p152
      %p154 = scmp.ne.s32.totalorder %s143, %s146
      %p155 = scmp.eq.s32.totalorder %s44, 3
      %p156 = por %p154, %p155
      %p157 = scmp.ne.s32.totalorder %s146, %s147
      %p158 = scmp.eq.s32.totalorder %s44, 0
      %p159 = por %p157, %p158
      %p160 = scmp.ne.s32.totalorder %s146, %s147
      %p161 = scmp.eq.s32.totalorder %s45, 3
      %p162 = por %p160, %p161
      %p164 = scmp.ne.s32.totalorder %s147, %s163
      %p165 = scmp.eq.s32.totalorder %s45, 0
      %p166 = por %p164, %p165
      %s167 = ssub.s32 %s46, %s58
      %p168 = scmp.eq.s32.totalorder %s167, 0
      %s170 = sadd.s32 %s169, 1
      %s171 = scalar_select %p168, %s169, %s170
      %p174 = pneg %p168
      %p175 = scmp.eq.s32.totalorder %s39, 3
      %p176 = por %p174, %p175
      %p177 = scmp.ne.s32.totalorder %s169, %s172
      %p178 = scmp.eq.s32.totalorder %s39, 0
      %p179 = por %p177, %p178
      %p180 = scmp.ne.s32.totalorder %s169, %s172
      %p181 = scmp.eq.s32.totalorder %s44, 3
      %p182 = por %p180, %p181
      %p183 = scmp.ne.s32.totalorder %s172, %s173
      %p184 = scmp.eq.s32.totalorder %s44, 0
      %p185 = por %p183, %p184
      %p186 = scmp.ne.s32.totalorder %s172, %s173
      %p187 = scmp.eq.s32.totalorder %s45, 3
      %p188 = por %p186, %p187
      %p190 = scmp.ne.s32.totalorder %s173, %s189
      %p191 = scmp.eq.s32.totalorder %s45, 0
      %p192 = por %p190, %p191
      %s194 = sadd.s32 %s193, 1
      %p197 = scmp.eq.s32.totalorder %s39, 3
      %p198 = scmp.ne.s32.totalorder %s193, %s195
      %p199 = scmp.eq.s32.totalorder %s39, 0
      %p200 = por %p198, %p199
      %p201 = scmp.ne.s32.totalorder %s193, %s195
      %p202 = scmp.eq.s32.totalorder %s44, 3
      %p203 = por %p201, %p202
      %p204 = scmp.ne.s32.totalorder %s195, %s196
      %p205 = scmp.eq.s32.totalorder %s44, 0
      %p206 = por %p204, %p205
      %p207 = scmp.ne.s32.totalorder %s195, %s196
      %p208 = scmp.eq.s32.totalorder %s45, 3
      %p209 = por %p207, %p208
      %p211 = scmp.ne.s32.totalorder %s196, %s210
      %p212 = scmp.eq.s32.totalorder %s45, 0
      %p213 = por %p211, %p212
      %s215 = sadd.s32 %s214, 1
      %p218 = scmp.eq.s32.totalorder %s39, 3
      %p219 = scmp.ne.s32.totalorder %s214, %s216
      %p220 = scmp.eq.s32.totalorder %s39, 0
      %p221 = por %p219, %p220
      %p222 = scmp.ne.s32.totalorder %s214, %s216
      %p223 = scmp.eq.s32.totalorder %s44, 3
      %p224 = por %p222, %p223
      %p225 = scmp.ne.s32.totalorder %s216, %s217
      %p226 = scmp.eq.s32.totalorder %s44, 0
      %p227 = por %p225, %p226
      %p228 = scmp.ne.s32.totalorder %s216, %s217
      %p229 = scmp.eq.s32.totalorder %s45, 3
      %p230 = por %p228, %p229
      %p232 = scmp.ne.s32.totalorder %s217, %s231
      %p233 = scmp.eq.s32.totalorder %s45, 0
      %p234 = por %p232, %p233
      %s236 = sadd.s32 %s235, 1
      %p239 = scmp.eq.s32.totalorder %s39, 3
      %p240 = scmp.ne.s32.totalorder %s235, %s237
      %p241 = scmp.eq.s32.totalorder %s39, 0
      %p242 = por %p240, %p241
      %p243 = scmp.ne.s32.totalorder %s235, %s237
      %p244 = scmp.eq.s32.totalorder %s44, 3
      %p245 = por %p243, %p244
      %p246 = scmp.ne.s32.totalorder %s237, %s238
      %p247 = scmp.eq.s32.totalorder %s44, 0
      %p248 = por %p246, %p247
      %p249 = scmp.ne.s32.totalorder %s237, %s238
      %p250 = scmp.eq.s32.totalorder %s45, 3
      %p251 = por %p249, %p250
      %p253 = scmp.ne.s32.totalorder %s238, %s252
      %p254 = scmp.eq.s32.totalorder %s45, 0
      %p255 = por %p253, %p254
      %s256 = ssub.s32 %s47, %s54
      %p257 = scmp.eq.s32.totalorder %s256, 0
      %s259 = sadd.s32 %s258, 1
      %s260 = scalar_select %p257, %s258, %s259
      %p263 = pneg %p257
      %p264 = scmp.eq.s32.totalorder %s39, 3
      %p265 = por %p263, %p264
      %p266 = scmp.ne.s32.totalorder %s258, %s261
      %p267 = scmp.eq.s32.totalorder %s39, 0
      %p268 = por %p266, %p267
      %p269 = scmp.ne.s32.totalorder %s258, %s261
      %p270 = scmp.eq.s32.totalorder %s44, 3
      %p271 = por %p269, %p270
      %p272 = scmp.ne.s32.totalorder %s261, %s262
      %p273 = scmp.eq.s32.totalorder %s44, 0
      %p274 = por %p272, %p273
      %p275 = scmp.ne.s32.totalorder %s261, %s262
      %p276 = scmp.eq.s32.totalorder %s45, 3
      %p277 = por %p275, %p276
      %p279 = scmp.ne.s32.totalorder %s262, %s278
      %p280 = scmp.eq.s32.totalorder %s45, 0
      %p281 = por %p279, %p280
      %s283 = sadd.s32 %s282, 1
      %p286 = scmp.eq.s32.totalorder %s39, 3
      %p287 = scmp.ne.s32.totalorder %s282, %s284
      %p288 = scmp.eq.s32.totalorder %s39, 0
      %p289 = por %p287, %p288
      %p290 = scmp.ne.s32.totalorder %s282, %s284
      %p291 = scmp.eq.s32.totalorder %s44, 3
      %p292 = por %p290, %p291
      %p293 = scmp.ne.s32.totalorder %s284, %s285
      %p294 = scmp.eq.s32.totalorder %s44, 0
      %p295 = por %p293, %p294
      %p296 = scmp.ne.s32.totalorder %s284, %s285
      %p297 = scmp.eq.s32.totalorder %s45, 3
      %p298 = por %p296, %p297
      %p300 = scmp.ne.s32.totalorder %s285, %s299
      %p301 = scmp.eq.s32.totalorder %s45, 0
      %p302 = por %p300, %p301
      %s304 = sadd.s32 %s303, 1
      %p307 = scmp.eq.s32.totalorder %s39, 3
      %p308 = scmp.ne.s32.totalorder %s303, %s305
      %p309 = scmp.eq.s32.totalorder %s39, 0
      %p310 = por %p308, %p309
      %p311 = scmp.ne.s32.totalorder %s303, %s305
      %p312 = scmp.eq.s32.totalorder %s44, 3
      %p313 = por %p311, %p312
      %p314 = scmp.ne.s32.totalorder %s305, %s306
      %p315 = scmp.eq.s32.totalorder %s44, 0
      %p316 = por %p314, %p315
      %p317 = scmp.ne.s32.totalorder %s305, %s306
      %p318 = scmp.eq.s32.totalorder %s45, 3
      %p319 = por %p317, %p318
      %p321 = scmp.ne.s32.totalorder %s306, %s320
      %p322 = scmp.eq.s32.totalorder %s45, 0
      %p323 = por %p321, %p322
      %s325 = sadd.s32 %s324, 1
      %p328 = scmp.eq.s32.totalorder %s39, 3
      %p329 = scmp.ne.s32.totalorder %s324, %s326
      %p330 = scmp.eq.s32.totalorder %s39, 0
      %p331 = por %p329, %p330
      %p332 = scmp.ne.s32.totalorder %s324, %s326
      %p333 = scmp.eq.s32.totalorder %s44, 3
      %p334 = por %p332, %p333
      %p335 = scmp.ne.s32.totalorder %s326, %s327
      %p336 = scmp.eq.s32.totalorder %s44, 0
      %p337 = por %p335, %p336
      %p338 = scmp.ne.s32.totalorder %s326, %s327
      %p339 = scmp.eq.s32.totalorder %s45, 3
      %p340 = por %p338, %p339
      %p342 = scmp.ne.s32.totalorder %s327, %s341
      %p343 = scmp.eq.s32.totalorder %s45, 0
      %p344 = por %p342, %p343
      %s345 = ssub.s32 %s46, %s58
      %p346 = scmp.eq.s32.totalorder %s345, 0
      %s348 = sadd.s32 %s347, 1
      %s349 = scalar_select %p346, %s347, %s348
      %p352 = pneg %p346
      %p353 = scmp.eq.s32.totalorder %s39, 3
      %p354 = por %p352, %p353
      %p355 = scmp.ne.s32.totalorder %s347, %s350
      %p356 = scmp.eq.s32.totalorder %s39, 0
      %p357 = por %p355, %p356
      %p358 = scmp.ne.s32.totalorder %s347, %s350
      %p359 = scmp.eq.s32.totalorder %s44, 3
      %p360 = por %p358, %p359
      %p361 = scmp.ne.s32.totalorder %s350, %s351
      %p362 = scmp.eq.s32.totalorder %s44, 0
      %p363 = por %p361, %p362
      %p364 = scmp.ne.s32.totalorder %s350, %s351
      %p365 = scmp.eq.s32.totalorder %s45, 3
      %p366 = por %p364, %p365
      %p368 = scmp.ne.s32.totalorder %s351, %s367
      %p369 = scmp.eq.s32.totalorder %s45, 0
      %p370 = por %p368, %p369
      %p371 = scmp.le.s32.totalorder 1, %s39
      %p372 = scmp.lt.s32.totalorder %s39, 5
      %p373 = pnand %p371, %p372
      %p374 = pneg %p373
      // Predicated region
      $region9: #{cedr_knrm_forward.1} parent=5 // pred_check
        _
      $region10: #{cedr_knrm_forward.1} parent=5 // pred_check_branch
        %376 = sbr.rel (%p373) target = $region12
      $region11: #{cedr_knrm_forward.1} parent=5 // pred_region
        %s377 = ssub.s32 %s39, 1
        // Predicated region
        $region13: #{cedr_knrm_forward.1} parent=11 // pred_check
          %p378 = pneg %p206
        $region14: #{cedr_knrm_forward.1} parent=11 // pred_check_branch
          %380 = sbr.rel (%p378) target = $region16
        $region15: #{cedr_knrm_forward.1} parent=11 // pred_region
          %s382 = ssub.s32 176, 176
          %383 = vsyncadd [#allocation16], %s382
          %s384 = sshll.u32 [#allocation15], 4
          %s385 = int_to_ptr.vmem [resolvable:$true] %s384
          %390 = dma.hbm_to_vmem [thread:$0]  %s6, 176, %s385, [#allocation16], 16, 16, 1
        $region16: #{cedr_knrm_forward.1} parent=11 // pred_fallthru
          _
        // Predicated region
        $region17: #{cedr_knrm_forward.1} parent=11 // pred_check
          %p391 = pneg %p227
        $region18: #{cedr_knrm_forward.1} parent=11 // pred_check_branch
          %393 = sbr.rel (%p391) target = $region20
        $region19: #{cedr_knrm_forward.1} parent=11 // pred_region
          %s395 = ssub.s32 176, 176
          %396 = vsyncadd [#allocation16], %s395
          %s397 = sshll.u32 [#allocation17], 4
          %s398 = int_to_ptr.vmem [resolvable:$true] %s397
          %403 = dma.hbm_to_vmem [thread:$0]  %s7, 176, %s398, [#allocation16], 16, 16, 1
        $region20: #{cedr_knrm_forward.1} parent=11 // pred_fallthru
          _
        // Predicated region
        $region21: #{cedr_knrm_forward.1} parent=11 // pred_check
          %p404 = pneg %p248
        $region22: #{cedr_knrm_forward.1} parent=11 // pred_check_branch
          %406 = sbr.rel (%p404) target = $region24
        $region23: #{cedr_knrm_forward.1} parent=11 // pred_region
          %s408 = ssub.s32 512, 512
          %409 = vsyncadd [#allocation19], %s408
          %s410 = sshll.u32 [#allocation18], 4
          %s411 = int_to_ptr.vmem [resolvable:$true] %s410
          %416 = dma.hbm_to_vmem [thread:$0]  %s8, 512, %s411, [#allocation19], 128, 128, 8
        $region24: #{cedr_knrm_forward.1} parent=11 // pred_fallthru
          _
        // Predicated region
        $region25: #{cedr_knrm_forward.1} parent=11 // pred_check
          %p417 = pneg %p295
        $region26: #{cedr_knrm_forward.1} parent=11 // pred_check_branch
          %419 = sbr.rel (%p417) target = $region28
        $region27: #{cedr_knrm_forward.1} parent=11 // pred_region
          %s421 = ssub.s32 16, 16
          %422 = vsyncadd [#allocation10], %s421
          %s424 = sshll.u32 [#allocation21], 4
          %s425 = int_to_ptr.vmem [resolvable:$true] %s424
          %427 = dma.hbm_to_vmem [thread:$0]  %s10, 16, %s425, [#allocation10]
        $region28: #{cedr_knrm_forward.1} parent=11 // pred_fallthru
          _
        // Predicated region
        $region29: #{cedr_knrm_forward.1} parent=11 // pred_check
          %p428 = pneg %p316
        $region30: #{cedr_knrm_forward.1} parent=11 // pred_check_branch
          %430 = sbr.rel (%p428) target = $region32
        $region31: #{cedr_knrm_forward.1} parent=11 // pred_region
          %s432 = ssub.s32 256, 256
          %433 = vsyncadd [#allocation13], %s432
          %s434 = sshll.u32 [#allocation22], 4
          %s435 = int_to_ptr.vmem [resolvable:$true] %s434
          %440 = dma.hbm_to_vmem [thread:$0]  %s11, 256, %s435, [#allocation13], 128, 128, 8
        $region32: #{cedr_knrm_forward.1} parent=11 // pred_fallthru
          _
        // Predicated region
        $region33: #{cedr_knrm_forward.1} parent=11 // pred_check
          %p441 = pneg %p337
        $region34: #{cedr_knrm_forward.1} parent=11 // pred_check_branch
          %443 = sbr.rel (%p441) target = $region36
        $region35: #{cedr_knrm_forward.1} parent=11 // pred_region
          _
        $region36: #{cedr_knrm_forward.1} parent=11 // pred_fallthru
          _
      $region12: #{cedr_knrm_forward.1} parent=5 // pred_fallthru
        _
      %p444 = scmp.lt.s32.totalorder %s39, 4
      // Predicated region
      $region37: #{cedr_knrm_forward.1} parent=5 // pred_check
        %p445 = pneg %p444
      $region38: #{cedr_knrm_forward.1} parent=5 // pred_check_branch
        %447 = sbr.rel (%p445) target = $region40
      $region39: #{cedr_knrm_forward.1} parent=5 // pred_region
        // Predicated region
        $region41: #{cedr_knrm_forward.1} parent=39 // pred_check
          %p448 = pneg %p75
        $region42: #{cedr_knrm_forward.1} parent=39 // pred_check_branch
          %450 = sbr.rel (%p448) target = $region44
        $region43: #{cedr_knrm_forward.1} parent=39 // pred_region
          %s451 = sand.u32 %s39, 1
          %s452 = scalar_lea.sflag [#allocation7], %s451
          %s453 = sand.u32 %s65, 1
          %s454 = smul.addr %s453, 16
          %s455 = scalar_lea.vmem [#allocation6], %s454
          %s456 = sld [smem:[#allocation4 + %s47]]
          %s458 = ssub.s32 256, 256
          %459 = vsyncadd %s452, %s458
          %s460 = smul.addr %s46, 4
          %s461 = smul.addr %s456, 8
          %s462 = sadd.s32 %s460, %s461
          %s463 = smul.addr %s462, 64
          %s464 = scalar_lea.hbm %s1, %s463
          %s465 = sshll.u32 %s455, 4
          %s466 = int_to_ptr.vmem [resolvable:$true] %s465
          %471 = dma.hbm_to_vmem [thread:$0]  %s464, 256, %s466, %s452, 64, 64, 4
        $region44: #{cedr_knrm_forward.1} parent=39 // pred_fallthru
          _
        // Predicated region
        $region45: #{cedr_knrm_forward.1} parent=39 // pred_check
          %p472 = pneg %p101
        $region46: #{cedr_knrm_forward.1} parent=39 // pred_check_branch
          %474 = sbr.rel (%p472) target = $region48
        $region47: #{cedr_knrm_forward.1} parent=39 // pred_region
          %s475 = sand.u32 %s39, 1
          %s476 = scalar_lea.sflag [#allocation10], %s475
          %s477 = sand.u32 %s91, 1
          %s478 = smul.addr %s477, 16
          %s479 = scalar_lea.vmem [#allocation9], %s478
          %s481 = ssub.s32 256, 256
          %482 = vsyncadd %s476, %s481
          %s483 = smul.addr %s46, 2
          %s484 = smul.addr %s483, 128
          %s485 = scalar_lea.hbm %s2, %s484
          %s486 = sshll.u32 %s479, 4
          %s487 = int_to_ptr.vmem [resolvable:$true] %s486
          %492 = dma.hbm_to_vmem [thread:$0]  %s485, 256, %s487, %s476, 128, 128, 8
        $region48: #{cedr_knrm_forward.1} parent=39 // pred_fallthru
          _
        // Predicated region
        $region49: #{cedr_knrm_forward.1} parent=39 // pred_check
          %p493 = pneg %p127
        $region50: #{cedr_knrm_forward.1} parent=39 // pred_check_branch
          %495 = sbr.rel (%p493) target = $region52
        $region51: #{cedr_knrm_forward.1} parent=39 // pred_region
          %s496 = sand.u32 %s39, 1
          %s497 = scalar_lea.sflag [#allocation10], %s496
          %s498 = sand.u32 %s117, 1
          %s499 = scalar_lea.vmem [#allocation11], %s498
          %s501 = ssub.s32 16, 16
          %502 = vsyncadd %s497, %s501
          %s503 = smul.addr %s46, 16
          %s504 = scalar_lea.hbm %s3, %s503
          %s506 = sshll.u32 %s499, 4
          %s507 = int_to_ptr.vmem [resolvable:$true] %s506
          %509 = dma.hbm_to_vmem [thread:$0]  %s504, 16, %s507, %s497
        $region52: #{cedr_knrm_forward.1} parent=39 // pred_fallthru
          _
        // Predicated region
        $region53: #{cedr_knrm_forward.1} parent=39 // pred_check
          %p510 = pneg %p153
        $region54: #{cedr_knrm_forward.1} parent=39 // pred_check_branch
          %512 = sbr.rel (%p510) target = $region56
        $region55: #{cedr_knrm_forward.1} parent=39 // pred_region
          %s513 = sand.u32 %s39, 1
          %s514 = scalar_lea.sflag [#allocation13], %s513
          %s515 = sand.u32 %s143, 1
          %s516 = scalar_lea.vmem [#allocation12], %s515
          %s518 = ssub.s32 16, 16
          %519 = vsyncadd %s514, %s518
          %s520 = smul.addr %s46, 16
          %s521 = scalar_lea.hbm %s4, %s520
          %s523 = sshll.u32 %s516, 4
          %s524 = int_to_ptr.vmem [resolvable:$true] %s523
          %526 = dma.hbm_to_vmem [thread:$0]  %s521, 16, %s524, %s514
        $region56: #{cedr_knrm_forward.1} parent=39 // pred_fallthru
          _
        // Predicated region
        $region57: #{cedr_knrm_forward.1} parent=39 // pred_check
          %p527 = pneg %p179
        $region58: #{cedr_knrm_forward.1} parent=39 // pred_check_branch
          %529 = sbr.rel (%p527) target = $region60
        $region59: #{cedr_knrm_forward.1} parent=39 // pred_region
          %s530 = sand.u32 %s39, 1
          %s531 = scalar_lea.sflag [#allocation13], %s530
          %s532 = sand.u32 %s169, 1
          %s533 = scalar_lea.vmem [#allocation14], %s532
          %s535 = ssub.s32 16, 16
          %536 = vsyncadd %s531, %s535
          %s537 = smul.addr %s46, 16
          %s538 = scalar_lea.hbm %s5, %s537
          %s540 = sshll.u32 %s533, 4
          %s541 = int_to_ptr.vmem [resolvable:$true] %s540
          %543 = dma.hbm_to_vmem [thread:$0]  %s538, 16, %s541, %s531
        $region60: #{cedr_knrm_forward.1} parent=39 // pred_fallthru
          _
        // Predicated region
        $region61: #{cedr_knrm_forward.1} parent=39 // pred_check
          %p544 = pneg %p268
        $region62: #{cedr_knrm_forward.1} parent=39 // pred_check_branch
          %546 = sbr.rel (%p544) target = $region64
        $region63: #{cedr_knrm_forward.1} parent=39 // pred_region
          %s547 = sand.u32 %s39, 1
          %s548 = scalar_lea.sflag [#allocation7], %s547
          %s549 = sand.u32 %s258, 1
          %s550 = smul.addr %s549, 16
          %s551 = scalar_lea.vmem [#allocation20], %s550
          %s553 = ssub.s32 256, 256
          %554 = vsyncadd %s548, %s553
          %s555 = smul.addr %s47, 2
          %s556 = smul.addr %s555, 128
          %s557 = scalar_lea.hbm %s9, %s556
          %s558 = sshll.u32 %s551, 4
          %s559 = int_to_ptr.vmem [resolvable:$true] %s558
          %564 = dma.hbm_to_vmem [thread:$0]  %s557, 256, %s559, %s548, 128, 128, 8
        $region64: #{cedr_knrm_forward.1} parent=39 // pred_fallthru
          _
      $region40: #{cedr_knrm_forward.1} parent=5 // pred_fallthru
        _
      %p565 = scmp.le.s32.totalorder 1, %s39
      %p566 = scmp.lt.s32.totalorder %s39, 5
      %p567 = pnand %p565, %p566
      %p568 = pneg %p567
      // Predicated region
      $region65: #{cedr_knrm_forward.1} parent=5 // pred_check
        _
      $region66: #{cedr_knrm_forward.1} parent=5 // pred_check_branch
        %570 = sbr.rel (%p567) target = $region68
      $region67: #{cedr_knrm_forward.1} parent=5 // pred_region
        %s571 = ssub.s32 %s39, 1
        %s572 = sand.u32 %s44, 1
        %s573 = scalar_lea.sflag [#allocation7], %s572
        %s574 = sand.u32 %s68, 1
        %s575 = smul.addr %s574, 16
        %s576 = scalar_lea.vmem [#allocation6], %s575
        // Predicated region
        $region69: #{cedr_knrm_forward.1} parent=67 // pred_check
          %p577 = pneg %p81
        $region70: #{cedr_knrm_forward.1} parent=67 // pred_check_branch
          %579 = sbr.rel (%p577) target = $region72
        $region71: #{cedr_knrm_forward.1} parent=67 // pred_region
          %580 = dma.done %s573, 256
        $region72: #{cedr_knrm_forward.1} parent=67 // pred_fallthru
          _
        %s581 = sand.u32 %s44, 1
        %s582 = scalar_lea.sflag [#allocation10], %s581
        %s583 = sand.u32 %s94, 1
        %s584 = smul.addr %s583, 16
        %s585 = scalar_lea.vmem [#allocation9], %s584
        // Predicated region
        $region73: #{cedr_knrm_forward.1} parent=67 // pred_check
          %p586 = pneg %p107
        $region74: #{cedr_knrm_forward.1} parent=67 // pred_check_branch
          %588 = sbr.rel (%p586) target = $region76
        $region75: #{cedr_knrm_forward.1} parent=67 // pred_region
          %589 = dma.done %s582, 256
        $region76: #{cedr_knrm_forward.1} parent=67 // pred_fallthru
          _
        %s590 = sand.u32 %s44, 1
        %s591 = scalar_lea.sflag [#allocation10], %s590
        %s592 = sand.u32 %s120, 1
        %s593 = scalar_lea.vmem [#allocation11], %s592
        // Predicated region
        $region77: #{cedr_knrm_forward.1} parent=67 // pred_check
          %p594 = pneg %p133
        $region78: #{cedr_knrm_forward.1} parent=67 // pred_check_branch
          %596 = sbr.rel (%p594) target = $region80
        $region79: #{cedr_knrm_forward.1} parent=67 // pred_region
          %597 = dma.done %s591, 16
        $region80: #{cedr_knrm_forward.1} parent=67 // pred_fallthru
          _
        %s598 = sand.u32 %s44, 1
        %s599 = scalar_lea.sflag [#allocation13], %s598
        %s600 = sand.u32 %s146, 1
        %s601 = scalar_lea.vmem [#allocation12], %s600
        // Predicated region
        $region81: #{cedr_knrm_forward.1} parent=67 // pred_check
          %p602 = pneg %p159
        $region82: #{cedr_knrm_forward.1} parent=67 // pred_check_branch
          %604 = sbr.rel (%p602) target = $region84
        $region83: #{cedr_knrm_forward.1} parent=67 // pred_region
          %605 = dma.done %s599, 16
        $region84: #{cedr_knrm_forward.1} parent=67 // pred_fallthru
          _
        %s606 = sand.u32 %s44, 1
        %s607 = scalar_lea.sflag [#allocation13], %s606
        %s608 = sand.u32 %s172, 1
        %s609 = scalar_lea.vmem [#allocation14], %s608
        // Predicated region
        $region85: #{cedr_knrm_forward.1} parent=67 // pred_check
          %p610 = pneg %p185
        $region86: #{cedr_knrm_forward.1} parent=67 // pred_check_branch
          %612 = sbr.rel (%p610) target = $region88
        $region87: #{cedr_knrm_forward.1} parent=67 // pred_region
          %613 = dma.done %s607, 16
        $region88: #{cedr_knrm_forward.1} parent=67 // pred_fallthru
          _
        // Predicated region
        $region89: #{cedr_knrm_forward.1} parent=67 // pred_check
          %p614 = pneg %p206
        $region90: #{cedr_knrm_forward.1} parent=67 // pred_check_branch
          %616 = sbr.rel (%p614) target = $region92
        $region91: #{cedr_knrm_forward.1} parent=67 // pred_region
          %617 = dma.done [#allocation16], 176
        $region92: #{cedr_knrm_forward.1} parent=67 // pred_fallthru
          _
        // Predicated region
        $region93: #{cedr_knrm_forward.1} parent=67 // pred_check
          %p618 = pneg %p227
        $region94: #{cedr_knrm_forward.1} parent=67 // pred_check_branch
          %620 = sbr.rel (%p618) target = $region96
        $region95: #{cedr_knrm_forward.1} parent=67 // pred_region
          %621 = dma.done [#allocation16], 176
        $region96: #{cedr_knrm_forward.1} parent=67 // pred_fallthru
          _
        // Predicated region
        $region97: #{cedr_knrm_forward.1} parent=67 // pred_check
          %p622 = pneg %p248
        $region98: #{cedr_knrm_forward.1} parent=67 // pred_check_branch
          %624 = sbr.rel (%p622) target = $region100
        $region99: #{cedr_knrm_forward.1} parent=67 // pred_region
          %625 = dma.done [#allocation19], 512
        $region100: #{cedr_knrm_forward.1} parent=67 // pred_fallthru
          _
        %s626 = sand.u32 %s44, 1
        %s627 = scalar_lea.sflag [#allocation7], %s626
        %s628 = sand.u32 %s261, 1
        %s629 = smul.addr %s628, 16
        %s630 = scalar_lea.vmem [#allocation20], %s629
        // Predicated region
        $region101: #{cedr_knrm_forward.1} parent=67 // pred_check
          %p631 = pneg %p274
        $region102: #{cedr_knrm_forward.1} parent=67 // pred_check_branch
          %633 = sbr.rel (%p631) target = $region104
        $region103: #{cedr_knrm_forward.1} parent=67 // pred_region
          %634 = dma.done %s627, 256
        $region104: #{cedr_knrm_forward.1} parent=67 // pred_fallthru
          _
        // Predicated region
        $region105: #{cedr_knrm_forward.1} parent=67 // pred_check
          %p635 = pneg %p295
        $region106: #{cedr_knrm_forward.1} parent=67 // pred_check_branch
          %637 = sbr.rel (%p635) target = $region108
        $region107: #{cedr_knrm_forward.1} parent=67 // pred_region
          %638 = dma.done [#allocation10], 16
        $region108: #{cedr_knrm_forward.1} parent=67 // pred_fallthru
          _
        // Predicated region
        $region109: #{cedr_knrm_forward.1} parent=67 // pred_check
          %p639 = pneg %p316
        $region110: #{cedr_knrm_forward.1} parent=67 // pred_check_branch
          %641 = sbr.rel (%p639) target = $region112
        $region111: #{cedr_knrm_forward.1} parent=67 // pred_region
          %642 = dma.done [#allocation13], 256
        $region112: #{cedr_knrm_forward.1} parent=67 // pred_fallthru
          _
        %s643 = sand.u32 %s44, 1
        %s644 = scalar_lea.sflag [#allocation7], %s643
        %s645 = sand.u32 %s68, 1
        %s646 = smul.addr %s645, 16
        %s647 = scalar_lea.vmem [#allocation6], %s646
        %p648 = pneg %p81
        %p649 = pneg %p78
        %s650 = sand.u32 %s44, 1
        %s651 = scalar_lea.sflag [#allocation10], %s650
        %s652 = sand.u32 %s94, 1
        %s653 = smul.addr %s652, 16
        %s654 = scalar_lea.vmem [#allocation9], %s653
        %p655 = pneg %p107
        %p656 = pneg %p104
        %s657 = sand.u32 %s44, 1
        %s658 = scalar_lea.sflag [#allocation10], %s657
        %s659 = sand.u32 %s120, 1
        %s660 = scalar_lea.vmem [#allocation11], %s659
        %p661 = pneg %p133
        %p662 = pneg %p130
        %s663 = sand.u32 %s44, 1
        %s664 = scalar_lea.sflag [#allocation13], %s663
        %s665 = sand.u32 %s146, 1
        %s666 = scalar_lea.vmem [#allocation12], %s665
        %p667 = pneg %p159
        %p668 = pneg %p156
        %s669 = sand.u32 %s44, 1
        %s670 = scalar_lea.sflag [#allocation13], %s669
        %s671 = sand.u32 %s172, 1
        %s672 = scalar_lea.vmem [#allocation14], %s671
        %p673 = pneg %p185
        %p674 = pneg %p182
        %p675 = pneg %p206
        %p676 = pneg %p203
        %p677 = pneg %p227
        %p678 = pneg %p224
        %p679 = pneg %p248
        %p680 = pneg %p245
        %s681 = sand.u32 %s44, 1
        %s682 = scalar_lea.sflag [#allocation7], %s681
        %s683 = sand.u32 %s261, 1
        %s684 = smul.addr %s683, 16
        %s685 = scalar_lea.vmem [#allocation20], %s684
        %p686 = pneg %p274
        %p687 = pneg %p271
        %p688 = pneg %p295
        %p689 = pneg %p292
        %p690 = pneg %p316
        %p691 = pneg %p313
        %p692 = pneg %p337
        %p693 = pneg %p334
        %p694 = pneg %p363
        %p695 = pneg %p360
        %s696 = sand.u32 %s350, 1
        %s697 = scalar_lea.sflag [#allocation8], %s696
        %s698 = sand.u32 %s350, 1
        %s699 = scalar_lea.vmem [#allocation23], %s698
        %s700 = sld [smem:[#allocation4 + %s49]]
        %p702 = scmp.eq.s32.totalorder %s49, 0
        // Predicated region
        $region113: #{cedr_knrm_forward.1} parent=67 // pred_check
          %p703 = pneg %p702
        $region114: #{cedr_knrm_forward.1} parent=67 // pred_check_branch
          %705 = sbr.rel (%p703) target = $region116
        $region115: #{cedr_knrm_forward.1} parent=67 // pred_region
          %v706 = vld [vmem:[%s609] sm:$0x1]
          %v707 = vld [vmem:[#allocation18] sm:$0xff]
          %v708 = vld [vmem:[#allocation18 + $0x8] sm:$0xff]
          %v709 = vld [vmem:[#allocation18 + $0x10] sm:$0xff]
          %v710 = vld [vmem:[#allocation18 + $0x18] sm:$0xff]
          %v711 = vld [vmem:[#allocation21] sm:$0x1]
          %vm712 = vcmask 261120
          %v714 = vsel %vm712, %v706, 0
          %716 = vmatprep.subr.mxu0 0.0
          %717 = vmatpush1.msra.mxu0 %v707
          %718 = vmatprep.subr.mxu0 0.0
          %719 = vmatpush1.msra.mxu0 %v708
          %720 = vmatprep.subr.mxu0 0.0
          %721 = vmatpush1.msra.mxu0 %v709
          %722 = vmatprep.subr.mxu0 0.0
          %723 = vmatpush1.msra.mxu0 %v710
          %724 = vmatprep.subr.mxu0 0.0
          %725 = vmatpush1.msra.mxu0 0.0
          %726 = vmatprep.subr.mxu0 0.0
          %727 = vmatpush1.msra.mxu0 0.0
          %728 = vmatprep.subr.mxu0 0.0
          %729 = vmatpush1.msra.mxu0 0.0
          %730 = vmatprep.subr.mxu0 0.0
          %731 = vmatpush1.msra.mxu0 0.0
          %732 = vmatprep.subr.mxu0 0.0
          %733 = vmatpush1.msra.mxu0 0.0
          %734 = vmatprep.subr.mxu0 0.0
          %735 = vmatpush1.msra.mxu0 0.0
          %736 = vmatprep.subr.mxu0 0.0
          %737 = vmatpush1.msra.mxu0 0.0
          %738 = vmatprep.subr.mxu0 0.0
          %739 = vmatpush1.msra.mxu0 0.0
          %740 = vmatprep.subr.mxu0 0.0
          %741 = vmatpush1.msra.mxu0 0.0
          %742 = vmatprep.subr.mxu0 0.0
          %743 = vmatpush1.msra.mxu0 0.0
          %744 = vmatprep.subr.mxu0 0.0
          %745 = vmatpush1.msra.mxu0 0.0
          %746 = vmatprep.subr.mxu0 0.0
          %747 = vmatpush1.msra.mxu0 0.0
          %748 = vmatprep.subr.mxu0 0.0
          %749 = vmatpush1.msra.mxu0 0.0
          %750 = vmatprep.subr.mxu0 0.0
          %751 = vmatpush1.msra.mxu0 0.0
          %752 = vmatprep.subr.mxu0 0.0
          %753 = vmatpush1.msra.mxu0 0.0
          %754 = vmatprep.subr.mxu0 0.0
          %755 = vmatpush1.msra.mxu0 0.0
          %756 = vmatprep.subr.mxu0 0.0
          %757 = vmatpush1.msra.mxu0 0.0
          %758 = vmatprep.subr.mxu0 0.0
          %759 = vmatpush1.msra.mxu0 0.0
          %760 = vmatprep.subr.mxu0 0.0
          %761 = vmatpush1.msra.mxu0 0.0
          %762 = vmatprep.subr.mxu0 0.0
          %763 = vmatpush1.msra.mxu0 0.0
          %764 = vmatprep.subr.mxu0 0.0
          %765 = vmatpush1.msra.mxu0 0.0
          %766 = vmatprep.subr.mxu0 0.0
          %767 = vmatpush1.msra.mxu0 0.0
          %768 = vmatprep.subr.mxu0 0.0
          %769 = vmatpush1.msra.mxu0 0.0
          %770 = vmatprep.subr.mxu0 0.0
          %771 = vmatpush1.msra.mxu0 0.0
          %772 = vmatprep.subr.mxu0 0.0
          %773 = vmatpush1.msra.mxu0 0.0
          %774 = vmatprep.subr.mxu0 0.0
          %775 = vmatpush1.msra.mxu0 0.0
          %776 = vmatprep.subr.mxu0 0.0
          %777 = vmatpush1.msra.mxu0 0.0
          %778 = vmatprep.subr.mxu0 0.0
          %779 = vmatpush1.msra.mxu0 0.0
          %780 = vmatprep.mubr.f32.mxu0 0.0
          %781 = vmatmul.mubr.f32.gmra.mrb[0].mxu0 %v714
          %v782 = vpop.f32.mrb[0].mxu0
          %v783 = vadd.f32 %v711, %v782
          %v784 = vpop.f32.mrb[0].mxu0
          %785 = vdwg.mxu0
          %vm786 = vcmask 122880
          %787 = vst.msk [vmem:[#allocation2] sm:$0x1] %vm786, %v783
        $region116: #{cedr_knrm_forward.1} parent=67 // pred_fallthru
          _
        %v788 = vld [vmem:[%s576] sm:$0xf]
        %v789 = vld [vmem:[%s576 + $0x4] sm:$0xf]
        %v790 = vunpack.c.l.bf16 %v788
        %v791 = vunpack.c.l.bf16 %v789
        %v792 = vmul.f32 %v790, %v790
        %v793 = vmul.f32 %v791, %v791
        %vm794 = vcmask 261121
        %v795 = vsel %vm794, %v792, 0.0
        %796 = vadd.xlane.f32.xlu0 %v795
        %v797 = vpop.xlane.xlu0 %796
        %vm798 = vcmask 261120
        %v799 = vsel %vm798, %v793, 0.0
        %800 = vadd.xlane.f32.xlu0 %v799
        %v801 = vpop.xlane.xlu0 %800
        %v802 = vadd.f32 %v797, 1e-12
        %v803 = vadd.f32 %v801, 1e-12
        %v804 = vrsqrt.pop %v802
        %v805 = vrsqrt.pop %v803
        %v806 = vmul.f32 %v790, %v804
        %v807 = vmul.f32 %v791, %v805
        %v808 = vld [vmem:[%s585] sm:$0x1f]
        %810 = vset.pattern.permute.xlu0 0
        %811 = vperm.xlu0 %810, %v808
        %v812 = vpop.permute.xlu0 %811
        %v813 = vrot.slane %v812, 7
        %v815 = vmul.f32 %v806, %v813
        %v816 = vpack.c.bf16 %v815, %v815
        %v817 = vpack.c.bf16 %v807, %v806
        %v819 = vshrl.u32 %v816, 16
        %v821 = vshll.u32 %v816, 16
        %v823 = vrot.slane %v821, 1
        %v824 = vor.u32 %v819, %v823
        %v826 = vshrl.u32 %v817, 16
        %v828 = vshll.u32 %v817, 16
        %v830 = vrot.slane %v828, 1
        %v831 = vor.u32 %v826, %v830
        %v833 = vsel %vm798, %v824, 0
        %v836 = vsel %vm798, %v831, 0
        %838 = vmatprep.subr.bf16.mxu0 0
        %839 = vmatpush1.bf16.xpose.msra.mxu0 %v836
        %840 = vmatprep.subr.bf16.mxu0 0
        %841 = vmatpush1.bf16.xpose.msra.mxu0 0
        %842 = vmatprep.subr.bf16.mxu0 0
        %843 = vmatpush1.bf16.xpose.msra.mxu0 0
        %844 = vmatprep.subr.bf16.mxu0 0
        %845 = vmatpush1.bf16.xpose.msra.mxu0 0
        %846 = vmatprep.subr.bf16.mxu0 0
        %847 = vmatpush1.bf16.xpose.msra.mxu0 0
        %848 = vmatprep.subr.bf16.mxu0 0
        %849 = vmatpush1.bf16.xpose.msra.mxu0 0
        %850 = vmatprep.subr.bf16.mxu0 0
        %851 = vmatpush1.bf16.xpose.msra.mxu0 0
        %852 = vmatprep.subr.bf16.mxu0 0
        %853 = vmatpush1.bf16.xpose.msra.mxu0 0
        %854 = vmatprep.subr.bf16.mxu0 0
        %855 = vmatpush1.bf16.xpose.msra.mxu0 0
        %856 = vmatprep.subr.bf16.mxu0 0
        %857 = vmatpush1.bf16.xpose.msra.mxu0 0
        %858 = vmatprep.subr.bf16.mxu0 0
        %859 = vmatpush1.bf16.xpose.msra.mxu0 0
        %860 = vmatprep.subr.bf16.mxu0 0
        %861 = vmatpush1.bf16.xpose.msra.mxu0 0
        %862 = vmatprep.subr.bf16.mxu0 0
        %863 = vmatpush1.bf16.xpose.msra.mxu0 0
        %864 = vmatprep.subr.bf16.mxu0 0
        %865 = vmatpush1.bf16.xpose.msra.mxu0 0
        %866 = vmatprep.subr.bf16.mxu0 0
        %867 = vmatpush1.bf16.xpose.msra.mxu0 0
        %868 = vmatprep.subr.bf16.mxu0 0
        %869 = vmatpush1.bf16.xpose.msra.mxu0 0
        %870 = vmatprep.mubr.bf16.mxu0 0
        %871 = vmatmul.mubr.bf16.gmra.mrb[0].mxu0 %v833
        %v872 = vpop.f32.mrb[0].mxu0
        %v873 = vadd.f32 0.0, %v872
        %v874 = vpop.f32.mrb[0].mxu0
        %v875 = vpop.f32.mrb[0].mxu0
        %v876 = vpop.f32.mrb[0].mxu0
        %877 = vdwg.mxu0
        %s878 = scalar_lea.vmem %s576, 8 [#allocation6]
        %v879 = vld [vmem:[%s878] sm:$0xf]
        %v880 = vld [vmem:[%s878 + $0x4] sm:$0xf]
        %v881 = vunpack.c.l.bf16 %v879
        %v882 = vunpack.c.l.bf16 %v880
        %v883 = vmul.f32 %v881, %v881
        %v884 = vmul.f32 %v882, %v882
        %v885 = vsel %vm794, %v883, 0.0
        %886 = vadd.xlane.f32.xlu0 %v885
        %v887 = vpop.xlane.xlu0 %886
        %v888 = vsel %vm798, %v884, 0.0
        %889 = vadd.xlane.f32.xlu0 %v888
        %v890 = vpop.xlane.xlu0 %889
        %v891 = vadd.f32 %v887, 1e-12
        %v892 = vadd.f32 %v890, 1e-12
        %v893 = vrsqrt.pop %v891
        %v894 = vrsqrt.pop %v892
        %v895 = vmul.f32 %v881, %v893
        %v896 = vmul.f32 %v882, %v894
        %s897 = scalar_lea.vmem %s585, 8 [#allocation9]
        %v898 = vld [vmem:[%s897] sm:$0x1f]
        %900 = vset.pattern.permute.xlu0 0
        %901 = vperm.xlu0 %900, %v898
        %v902 = vpop.permute.xlu0 %901
        %v903 = vrot.slane %v902, 7
        %v905 = vmul.f32 %v895, %v903
        %v906 = vpack.c.bf16 %v905, %v905
        %v907 = vpack.c.bf16 %v896, %v895
        %v909 = vshrl.u32 %v906, 16
        %v911 = vshll.u32 %v906, 16
        %v913 = vrot.slane %v911, 1
        %v914 = vor.u32 %v909, %v913
        %v916 = vshrl.u32 %v907, 16
        %v918 = vshll.u32 %v907, 16
        %v920 = vrot.slane %v918, 1
        %v921 = vor.u32 %v916, %v920
        %v923 = vsel %vm798, %v914, 0
        %v926 = vsel %vm798, %v921, 0
        %928 = vmatprep.subr.bf16.mxu0 0
        %929 = vmatpush1.bf16.xpose.msra.mxu0 %v926
        %930 = vmatprep.subr.bf16.mxu0 0
        %931 = vmatpush1.bf16.xpose.msra.mxu0 0
        %932 = vmatprep.subr.bf16.mxu0 0
        %933 = vmatpush1.bf16.xpose.msra.mxu0 0
        %934 = vmatprep.subr.bf16.mxu0 0
        %935 = vmatpush1.bf16.xpose.msra.mxu0 0
        %936 = vmatprep.subr.bf16.mxu0 0
        %937 = vmatpush1.bf16.xpose.msra.mxu0 0
        %938 = vmatprep.subr.bf16.mxu0 0
        %939 = vmatpush1.bf16.xpose.msra.mxu0 0
        %940 = vmatprep.subr.bf16.mxu0 0
        %941 = vmatpush1.bf16.xpose.msra.mxu0 0
        %942 = vmatprep.subr.bf16.mxu0 0
        %943 = vmatpush1.bf16.xpose.msra.mxu0 0
        %944 = vmatprep.subr.bf16.mxu0 0
        %945 = vmatpush1.bf16.xpose.msra.mxu0 0
        %946 = vmatprep.subr.bf16.mxu0 0
        %947 = vmatpush1.bf16.xpose.msra.mxu0 0
        %948 = vmatprep.subr.bf16.mxu0 0
        %949 = vmatpush1.bf16.xpose.msra.mxu0 0
        %950 = vmatprep.subr.bf16.mxu0 0
        %951 = vmatpush1.bf16.xpose.msra.mxu0 0
        %952 = vmatprep.subr.bf16.mxu0 0
        %953 = vmatpush1.bf16.xpose.msra.mxu0 0
        %954 = vmatprep.subr.bf16.mxu0 0
        %955 = vmatpush1.bf16.xpose.msra.mxu0 0
        %956 = vmatprep.subr.bf16.mxu0 0
        %957 = vmatpush1.bf16.xpose.msra.mxu0 0
        %958 = vmatprep.subr.bf16.mxu0 0
        %959 = vmatpush1.bf16.xpose.msra.mxu0 0
        %960 = vmatprep.mubr.bf16.mxu0 0
        %961 = vmatmul.mubr.bf16.gmra.mrb[0].mxu0 %v923
        %v962 = vpop.f32.mrb[0].mxu0
        %v963 = vadd.f32 0.0, %v962
        %v964 = vpop.f32.mrb[0].mxu0
        %v965 = vpop.f32.mrb[0].mxu0
        %v966 = vpop.f32.mrb[0].mxu0
        %967 = vdwg.mxu0
        %969 = vrot.lane.b32.xlu0 %v963, 15
        %v970 = vpop.permute.xlu0 %969
        %vm972 = vcmask 121856
        %v973 = vsel %vm972, %v873, %v970
        %v974 = vld [vmem:[#allocation15] sm:$0x1]
        %v975 = vld [vmem:[#allocation15 + $0x1] sm:$0x1]
        %v976 = vld [vmem:[#allocation15 + $0x2] sm:$0x1]
        %v977 = vld [vmem:[#allocation15 + $0x3] sm:$0x1]
        %v978 = vld [vmem:[#allocation15 + $0x4] sm:$0x1]
        %v979 = vld [vmem:[#allocation15 + $0x5] sm:$0x1]
        %v980 = vld [vmem:[#allocation15 + $0x6] sm:$0x1]
        %v981 = vld [vmem:[#allocation15 + $0x7] sm:$0x1]
        %v982 = vld [vmem:[#allocation15 + $0x8] sm:$0x1]
        %v983 = vld [vmem:[#allocation15 + $0x9] sm:$0x1]
        %v984 = vld [vmem:[#allocation15 + $0xa] sm:$0x1]
        %v996 = vlaneseq
        %v997 = vshrl.u32 %v996, 7
        %v998 = vsub.s32 0, %v997
        %v999 = vrot.slane %v974, %v998
        %v1000 = vlaneseq
        %v1001 = vshrl.u32 %v1000, 7
        %v1002 = vsub.s32 0, %v1001
        %v1003 = vrot.slane %v975, %v1002
        %v1004 = vlaneseq
        %v1005 = vshrl.u32 %v1004, 7
        %v1006 = vsub.s32 0, %v1005
        %v1007 = vrot.slane %v976, %v1006
        %v1008 = vlaneseq
        %v1009 = vshrl.u32 %v1008, 7
        %v1010 = vsub.s32 0, %v1009
        %v1011 = vrot.slane %v977, %v1010
        %v1012 = vlaneseq
        %v1013 = vshrl.u32 %v1012, 7
        %v1014 = vsub.s32 0, %v1013
        %v1015 = vrot.slane %v978, %v1014
        %v1016 = vlaneseq
        %v1017 = vshrl.u32 %v1016, 7
        %v1018 = vsub.s32 0, %v1017
        %v1019 = vrot.slane %v979, %v1018
        %v1020 = vlaneseq
        %v1021 = vshrl.u32 %v1020, 7
        %v1022 = vsub.s32 0, %v1021
        %v1023 = vrot.slane %v980, %v1022
        %v1024 = vlaneseq
        %v1025 = vshrl.u32 %v1024, 7
        %v1026 = vsub.s32 0, %v1025
        %v1027 = vrot.slane %v981, %v1026
        %v1028 = vlaneseq
        %v1029 = vshrl.u32 %v1028, 7
        %v1030 = vsub.s32 0, %v1029
        %v1031 = vrot.slane %v982, %v1030
        %v1032 = vlaneseq
        %v1033 = vshrl.u32 %v1032, 7
        %v1034 = vsub.s32 0, %v1033
        %v1035 = vrot.slane %v983, %v1034
        %v1036 = vlaneseq
        %v1037 = vshrl.u32 %v1036, 7
        %v1038 = vsub.s32 0, %v1037
        %v1039 = vrot.slane %v984, %v1038
        %1040 = vset.pattern.permute.xlu0 0
        %1041 = vperm.xlu0 %1040, %v999
        %v1042 = vpop.permute.xlu0 %1041
        %1044 = vset.pattern.permute.xlu0 0
        %1045 = vperm.xlu0 %1044, %v1003
        %v1046 = vpop.permute.xlu0 %1045
        %1048 = vset.pattern.permute.xlu0 0
        %1049 = vperm.xlu0 %1048, %v1007
        %v1050 = vpop.permute.xlu0 %1049
        %1052 = vset.pattern.permute.xlu0 0
        %1053 = vperm.xlu0 %1052, %v1011
        %v1054 = vpop.permute.xlu0 %1053
        %1056 = vset.pattern.permute.xlu0 0
        %1057 = vperm.xlu0 %1056, %v1015
        %v1058 = vpop.permute.xlu0 %1057
        %1060 = vset.pattern.permute.xlu0 0
        %1061 = vperm.xlu0 %1060, %v1019
        %v1062 = vpop.permute.xlu0 %1061
        %1064 = vset.pattern.permute.xlu0 0
        %1065 = vperm.xlu0 %1064, %v1023
        %v1066 = vpop.permute.xlu0 %1065
        %1068 = vset.pattern.permute.xlu0 0
        %1069 = vperm.xlu0 %1068, %v1027
        %v1070 = vpop.permute.xlu0 %1069
        %1072 = vset.pattern.permute.xlu0 0
        %1073 = vperm.xlu0 %1072, %v1031
        %v1074 = vpop.permute.xlu0 %1073
        %1076 = vset.pattern.permute.xlu0 0
        %1077 = vperm.xlu0 %1076, %v1035
        %v1078 = vpop.permute.xlu0 %1077
        %1080 = vset.pattern.permute.xlu0 0
        %1081 = vperm.xlu0 %1080, %v1039
        %v1082 = vpop.permute.xlu0 %1081
        %v1084 = vsub.f32 %v973, %v1042
        %v1085 = vsub.f32 %v973, %v1046
        %v1086 = vsub.f32 %v973, %v1050
        %v1087 = vsub.f32 %v973, %v1054
        %v1088 = vsub.f32 %v973, %v1058
        %v1089 = vsub.f32 %v973, %v1062
        %v1090 = vsub.f32 %v973, %v1066
        %v1091 = vsub.f32 %v973, %v1070
        %v1092 = vsub.f32 %v973, %v1074
        %v1093 = vsub.f32 %v973, %v1078
        %v1094 = vsub.f32 %v973, %v1082
        %v1095 = vmul.f32 %v1084, %v1084
        %v1096 = vmul.f32 %v1085, %v1085
        %v1097 = vmul.f32 %v1086, %v1086
        %v1098 = vmul.f32 %v1087, %v1087
        %v1099 = vmul.f32 %v1088, %v1088
        %v1100 = vmul.f32 %v1089, %v1089
        %v1101 = vmul.f32 %v1090, %v1090
        %v1102 = vmul.f32 %v1091, %v1091
        %v1103 = vmul.f32 %v1092, %v1092
        %v1104 = vmul.f32 %v1093, %v1093
        %v1105 = vmul.f32 %v1094, %v1094
        %v1106 = vsub.f32 0.0, %v1095
        %v1107 = vsub.f32 0.0, %v1096
        %v1108 = vsub.f32 0.0, %v1097
        %v1109 = vsub.f32 0.0, %v1098
        %v1110 = vsub.f32 0.0, %v1099
        %v1111 = vsub.f32 0.0, %v1100
        %v1112 = vsub.f32 0.0, %v1101
        %v1113 = vsub.f32 0.0, %v1102
        %v1114 = vsub.f32 0.0, %v1103
        %v1115 = vsub.f32 0.0, %v1104
        %v1116 = vsub.f32 0.0, %v1105
        %v1117 = vld [vmem:[#allocation17] sm:$0x1]
        %v1118 = vld [vmem:[#allocation17 + $0x1] sm:$0x1]
        %v1119 = vld [vmem:[#allocation17 + $0x2] sm:$0x1]
        %v1120 = vld [vmem:[#allocation17 + $0x3] sm:$0x1]
        %v1121 = vld [vmem:[#allocation17 + $0x4] sm:$0x1]
        %v1122 = vld [vmem:[#allocation17 + $0x5] sm:$0x1]
        %v1123 = vld [vmem:[#allocation17 + $0x6] sm:$0x1]
        %v1124 = vld [vmem:[#allocation17 + $0x7] sm:$0x1]
        %v1125 = vld [vmem:[#allocation17 + $0x8] sm:$0x1]
        %v1126 = vld [vmem:[#allocation17 + $0x9] sm:$0x1]
        %v1127 = vld [vmem:[#allocation17 + $0xa] sm:$0x1]
        %v1139 = vlaneseq
        %v1140 = vshrl.u32 %v1139, 7
        %v1141 = vsub.s32 0, %v1140
        %v1142 = vrot.slane %v1117, %v1141
        %v1143 = vlaneseq
        %v1144 = vshrl.u32 %v1143, 7
        %v1145 = vsub.s32 0, %v1144
        %v1146 = vrot.slane %v1118, %v1145
        %v1147 = vlaneseq
        %v1148 = vshrl.u32 %v1147, 7
        %v1149 = vsub.s32 0, %v1148
        %v1150 = vrot.slane %v1119, %v1149
        %v1151 = vlaneseq
        %v1152 = vshrl.u32 %v1151, 7
        %v1153 = vsub.s32 0, %v1152
        %v1154 = vrot.slane %v1120, %v1153
        %v1155 = vlaneseq
        %v1156 = vshrl.u32 %v1155, 7
        %v1157 = vsub.s32 0, %v1156
        %v1158 = vrot.slane %v1121, %v1157
        %v1159 = vlaneseq
        %v1160 = vshrl.u32 %v1159, 7
        %v1161 = vsub.s32 0, %v1160
        %v1162 = vrot.slane %v1122, %v1161
        %v1163 = vlaneseq
        %v1164 = vshrl.u32 %v1163, 7
        %v1165 = vsub.s32 0, %v1164
        %v1166 = vrot.slane %v1123, %v1165
        %v1167 = vlaneseq
        %v1168 = vshrl.u32 %v1167, 7
        %v1169 = vsub.s32 0, %v1168
        %v1170 = vrot.slane %v1124, %v1169
        %v1171 = vlaneseq
        %v1172 = vshrl.u32 %v1171, 7
        %v1173 = vsub.s32 0, %v1172
        %v1174 = vrot.slane %v1125, %v1173
        %v1175 = vlaneseq
        %v1176 = vshrl.u32 %v1175, 7
        %v1177 = vsub.s32 0, %v1176
        %v1178 = vrot.slane %v1126, %v1177
        %v1179 = vlaneseq
        %v1180 = vshrl.u32 %v1179, 7
        %v1181 = vsub.s32 0, %v1180
        %v1182 = vrot.slane %v1127, %v1181
        %1183 = vset.pattern.permute.xlu0 0
        %1184 = vperm.xlu0 %1183, %v1142
        %v1185 = vpop.permute.xlu0 %1184
        %1187 = vset.pattern.permute.xlu0 0
        %1188 = vperm.xlu0 %1187, %v1146
        %v1189 = vpop.permute.xlu0 %1188
        %1191 = vset.pattern.permute.xlu0 0
        %1192 = vperm.xlu0 %1191, %v1150
        %v1193 = vpop.permute.xlu0 %1192
        %1195 = vset.pattern.permute.xlu0 0
        %1196 = vperm.xlu0 %1195, %v1154
        %v1197 = vpop.permute.xlu0 %1196
        %1199 = vset.pattern.permute.xlu0 0
        %1200 = vperm.xlu0 %1199, %v1158
        %v1201 = vpop.permute.xlu0 %1200
        %1203 = vset.pattern.permute.xlu0 0
        %1204 = vperm.xlu0 %1203, %v1162
        %v1205 = vpop.permute.xlu0 %1204
        %1207 = vset.pattern.permute.xlu0 0
        %1208 = vperm.xlu0 %1207, %v1166
        %v1209 = vpop.permute.xlu0 %1208
        %1211 = vset.pattern.permute.xlu0 0
        %1212 = vperm.xlu0 %1211, %v1170
        %v1213 = vpop.permute.xlu0 %1212
        %1215 = vset.pattern.permute.xlu0 0
        %1216 = vperm.xlu0 %1215, %v1174
        %v1217 = vpop.permute.xlu0 %1216
        %1219 = vset.pattern.permute.xlu0 0
        %1220 = vperm.xlu0 %1219, %v1178
        %v1221 = vpop.permute.xlu0 %1220
        %1223 = vset.pattern.permute.xlu0 0
        %1224 = vperm.xlu0 %1223, %v1182
        %v1225 = vpop.permute.xlu0 %1224
        %v1227 = vmul.f32 %v1106, %v1185
        %v1228 = vmul.f32 %v1107, %v1189
        %v1229 = vmul.f32 %v1108, %v1193
        %v1230 = vmul.f32 %v1109, %v1197
        %v1231 = vmul.f32 %v1110, %v1201
        %v1232 = vmul.f32 %v1111, %v1205
        %v1233 = vmul.f32 %v1112, %v1209
        %v1234 = vmul.f32 %v1113, %v1213
        %v1235 = vmul.f32 %v1114, %v1217
        %v1236 = vmul.f32 %v1115, %v1221
        %v1237 = vmul.f32 %v1116, %v1225
        %v1238 = vmul.f32 %v1227, 1.442695
        %v1239 = vpow.pop %v1238
        %v1240 = vmul.f32 %v1228, 1.442695
        %v1241 = vpow.pop %v1240
        %v1242 = vmul.f32 %v1229, 1.442695
        %v1243 = vpow.pop %v1242
        %v1244 = vmul.f32 %v1230, 1.442695
        %v1245 = vpow.pop %v1244
        %v1246 = vmul.f32 %v1231, 1.442695
        %v1247 = vpow.pop %v1246
        %v1248 = vmul.f32 %v1232, 1.442695
        %v1249 = vpow.pop %v1248
        %v1250 = vmul.f32 %v1233, 1.442695
        %v1251 = vpow.pop %v1250
        %v1252 = vmul.f32 %v1234, 1.442695
        %v1253 = vpow.pop %v1252
        %v1254 = vmul.f32 %v1235, 1.442695
        %v1255 = vpow.pop %v1254
        %v1256 = vmul.f32 %v1236, 1.442695
        %v1257 = vpow.pop %v1256
        %v1258 = vmul.f32 %v1237, 1.442695
        %v1259 = vpow.pop %v1258
        %v1260 = vld [vmem:[%s601] sm:$0x1]
        %v1262 = vlaneseq
        %v1263 = vshrl.u32 %v1262, 7
        %v1264 = vsub.s32 0, %v1263
        %v1265 = vrot.slane %v1260, %v1264
        %v1267 = vmul.f32 %v1239, %v1265
        %v1268 = vmul.f32 %v1241, %v1265
        %v1269 = vmul.f32 %v1243, %v1265
        %v1270 = vmul.f32 %v1245, %v1265
        %v1271 = vmul.f32 %v1247, %v1265
        %v1272 = vmul.f32 %v1249, %v1265
        %v1273 = vmul.f32 %v1251, %v1265
        %v1274 = vmul.f32 %v1253, %v1265
        %v1275 = vmul.f32 %v1255, %v1265
        %v1276 = vmul.f32 %v1257, %v1265
        %v1277 = vmul.f32 %v1259, %v1265
        %vm1278 = vcmask 241664
        %v1279 = vsel %vm1278, %v1267, 0.0
        %1280 = vadd.xlane.f32.xlu0 %v1279
        %v1281 = vpop.xlane.xlu0 %1280
        %v1282 = vsel %vm1278, %v1268, 0.0
        %1283 = vadd.xlane.f32.xlu0 %v1282
        %v1284 = vpop.xlane.xlu0 %1283
        %v1285 = vsel %vm1278, %v1269, 0.0
        %1286 = vadd.xlane.f32.xlu0 %v1285
        %v1287 = vpop.xlane.xlu0 %1286
        %v1288 = vsel %vm1278, %v1270, 0.0
        %1289 = vadd.xlane.f32.xlu0 %v1288
        %v1290 = vpop.xlane.xlu0 %1289
        %v1291 = vsel %vm1278, %v1271, 0.0
        %1292 = vadd.xlane.f32.xlu0 %v1291
        %v1293 = vpop.xlane.xlu0 %1292
        %v1294 = vsel %vm1278, %v1272, 0.0
        %1295 = vadd.xlane.f32.xlu0 %v1294
        %v1296 = vpop.xlane.xlu0 %1295
        %v1297 = vsel %vm1278, %v1273, 0.0
        %1298 = vadd.xlane.f32.xlu0 %v1297
        %v1299 = vpop.xlane.xlu0 %1298
        %v1300 = vsel %vm1278, %v1274, 0.0
        %1301 = vadd.xlane.f32.xlu0 %v1300
        %v1302 = vpop.xlane.xlu0 %1301
        %v1303 = vsel %vm1278, %v1275, 0.0
        %1304 = vadd.xlane.f32.xlu0 %v1303
        %v1305 = vpop.xlane.xlu0 %1304
        %v1306 = vsel %vm1278, %v1276, 0.0
        %1307 = vadd.xlane.f32.xlu0 %v1306
        %v1308 = vpop.xlane.xlu0 %1307
        %v1309 = vsel %vm1278, %v1277, 0.0
        %1310 = vadd.xlane.f32.xlu0 %v1309
        %v1311 = vpop.xlane.xlu0 %1310
        %v1312 = vld [vmem:[%s593] sm:$0x1]
        %v1314 = vlaneseq
        %v1315 = vshrl.u32 %v1314, 7
        %v1316 = vsub.s32 0, %v1315
        %v1317 = vrot.slane %v1312, %v1316
        %1319 = vbcast.lane.b32.xlu0 %v1317, 256
        %v1320 = vpop.permute.xlu0 %1319
        %v1322 = vmul.f32 %v1281, %v1320
        %v1323 = vmul.f32 %v1284, %v1320
        %v1324 = vmul.f32 %v1287, %v1320
        %v1325 = vmul.f32 %v1290, %v1320
        %v1326 = vmul.f32 %v1293, %v1320
        %v1327 = vmul.f32 %v1296, %v1320
        %v1328 = vmul.f32 %v1299, %v1320
        %v1329 = vmul.f32 %v1302, %v1320
        %v1330 = vmul.f32 %v1305, %v1320
        %v1331 = vmul.f32 %v1308, %v1320
        %v1332 = vmul.f32 %v1311, %v1320
        %v1333 = vmax.f32 %v1322, 1e-10
        %v1334 = vmax.f32 %v1323, 1e-10
        %v1335 = vmax.f32 %v1324, 1e-10
        %v1336 = vmax.f32 %v1325, 1e-10
        %v1337 = vmax.f32 %v1326, 1e-10
        %v1338 = vmax.f32 %v1327, 1e-10
        %v1339 = vmax.f32 %v1328, 1e-10
        %v1340 = vmax.f32 %v1329, 1e-10
        %v1341 = vmax.f32 %v1330, 1e-10
        %v1342 = vmax.f32 %v1331, 1e-10
        %v1343 = vmax.f32 %v1332, 1e-10
        %v1344 = vlog2.pop %v1333
        %v1345 = vmul.f32 %v1344, 0.6931472
        %v1346 = vlog2.pop %v1334
        %v1347 = vmul.f32 %v1346, 0.6931472
        %v1348 = vlog2.pop %v1335
        %v1349 = vmul.f32 %v1348, 0.6931472
        %v1350 = vlog2.pop %v1336
        %v1351 = vmul.f32 %v1350, 0.6931472
        %v1352 = vlog2.pop %v1337
        %v1353 = vmul.f32 %v1352, 0.6931472
        %v1354 = vlog2.pop %v1338
        %v1355 = vmul.f32 %v1354, 0.6931472
        %v1356 = vlog2.pop %v1339
        %v1357 = vmul.f32 %v1356, 0.6931472
        %v1358 = vlog2.pop %v1340
        %v1359 = vmul.f32 %v1358, 0.6931472
        %v1360 = vlog2.pop %v1341
        %v1361 = vmul.f32 %v1360, 0.6931472
        %v1362 = vlog2.pop %v1342
        %v1363 = vmul.f32 %v1362, 0.6931472
        %v1364 = vlog2.pop %v1343
        %v1365 = vmul.f32 %v1364, 0.6931472
        %v1366 = vmul.f32 %v1345, 0.01
        %v1367 = vmul.f32 %v1347, 0.01
        %v1368 = vmul.f32 %v1349, 0.01
        %v1369 = vmul.f32 %v1351, 0.01
        %v1370 = vmul.f32 %v1353, 0.01
        %v1371 = vmul.f32 %v1355, 0.01
        %v1372 = vmul.f32 %v1357, 0.01
        %v1373 = vmul.f32 %v1359, 0.01
        %v1374 = vmul.f32 %v1361, 0.01
        %v1375 = vmul.f32 %v1363, 0.01
        %v1376 = vmul.f32 %v1365, 0.01
        %1388 = vset.pattern.permute.xlu0 0
        %1389 = vperm.xlu0 %1388, %v1366
        %v1390 = vpop.permute.xlu0 %1389
        %1391 = vset.pattern.permute.xlu0 0
        %1392 = vperm.xlu0 %1391, %v1367
        %v1393 = vpop.permute.xlu0 %1392
        %1394 = vset.pattern.permute.xlu0 0
        %1395 = vperm.xlu0 %1394, %v1368
        %v1396 = vpop.permute.xlu0 %1395
        %1397 = vset.pattern.permute.xlu0 0
        %1398 = vperm.xlu0 %1397, %v1369
        %v1399 = vpop.permute.xlu0 %1398
        %1400 = vset.pattern.permute.xlu0 0
        %1401 = vperm.xlu0 %1400, %v1370
        %v1402 = vpop.permute.xlu0 %1401
        %1403 = vset.pattern.permute.xlu0 0
        %1404 = vperm.xlu0 %1403, %v1371
        %v1405 = vpop.permute.xlu0 %1404
        %1406 = vset.pattern.permute.xlu0 0
        %1407 = vperm.xlu0 %1406, %v1372
        %v1408 = vpop.permute.xlu0 %1407
        %1409 = vset.pattern.permute.xlu0 0
        %1410 = vperm.xlu0 %1409, %v1373
        %v1411 = vpop.permute.xlu0 %1410
        %1412 = vset.pattern.permute.xlu0 0
        %1413 = vperm.xlu0 %1412, %v1374
        %v1414 = vpop.permute.xlu0 %1413
        %1415 = vset.pattern.permute.xlu0 0
        %1416 = vperm.xlu0 %1415, %v1375
        %v1417 = vpop.permute.xlu0 %1416
        %1418 = vset.pattern.permute.xlu0 0
        %1419 = vperm.xlu0 %1418, %v1376
        %v1420 = vpop.permute.xlu0 %1419
        %v1421 = vlaneseq
        %v1422 = vand.u32 %v1421, 127
        %v1423 = vlaneseq
        %v1424 = vshrl.u32 %v1423, 7
        %v1425 = vsub.s32 %v1422, %v1424
        %v1426 = vrot.slane %v1390, %v1425
        %v1427 = vlaneseq
        %v1428 = vshrl.u32 %v1427, 7
        %v1429 = vsub.s32 %v1422, %v1428
        %v1430 = vrot.slane %v1393, %v1429
        %v1431 = vlaneseq
        %v1432 = vshrl.u32 %v1431, 7
        %v1433 = vsub.s32 %v1422, %v1432
        %v1434 = vrot.slane %v1396, %v1433
        %v1435 = vlaneseq
        %v1436 = vshrl.u32 %v1435, 7
        %v1437 = vsub.s32 %v1422, %v1436
        %v1438 = vrot.slane %v1399, %v1437
        %v1439 = vlaneseq
        %v1440 = vshrl.u32 %v1439, 7
        %v1441 = vsub.s32 %v1422, %v1440
        %v1442 = vrot.slane %v1402, %v1441
        %v1443 = vlaneseq
        %v1444 = vshrl.u32 %v1443, 7
        %v1445 = vsub.s32 %v1422, %v1444
        %v1446 = vrot.slane %v1405, %v1445
        %v1447 = vlaneseq
        %v1448 = vshrl.u32 %v1447, 7
        %v1449 = vsub.s32 %v1422, %v1448
        %v1450 = vrot.slane %v1408, %v1449
        %v1451 = vlaneseq
        %v1452 = vshrl.u32 %v1451, 7
        %v1453 = vsub.s32 %v1422, %v1452
        %v1454 = vrot.slane %v1411, %v1453
        %v1455 = vlaneseq
        %v1456 = vshrl.u32 %v1455, 7
        %v1457 = vsub.s32 %v1422, %v1456
        %v1458 = vrot.slane %v1414, %v1457
        %v1459 = vlaneseq
        %v1460 = vshrl.u32 %v1459, 7
        %v1461 = vsub.s32 %v1422, %v1460
        %v1462 = vrot.slane %v1417, %v1461
        %v1463 = vlaneseq
        %v1464 = vshrl.u32 %v1463, 7
        %v1465 = vsub.s32 %v1422, %v1464
        %v1466 = vrot.slane %v1420, %v1465
        %vm1467 = vcmask 1041409
        %v1468 = vsel %vm1467, %v1430, %v1426
        %vm1469 = vcmask 1042434
        %v1470 = vsel %vm1469, %v1434, %v1468
        %vm1471 = vcmask 1043459
        %v1472 = vsel %vm1471, %v1438, %v1470
        %vm1473 = vcmask 1044484
        %v1474 = vsel %vm1473, %v1442, %v1472
        %vm1475 = vcmask 1045509
        %v1476 = vsel %vm1475, %v1446, %v1474
        %vm1477 = vcmask 1046534
        %v1478 = vsel %vm1477, %v1450, %v1476
        %vm1479 = vcmask 1047559
        %v1480 = vsel %vm1479, %v1454, %v1478
        %v1481 = vsel %vm1467, %v1462, %v1458
        %v1482 = vsel %vm1469, %v1466, %v1481
        %vm1485 = vcmask 39936
        %v1486 = vsel %vm1485, %v1480, 0.0
        %1487 = vadd.xlane.f32.xlu0 %v1486
        %v1488 = vpop.xlane.xlu0 %1487
        %vm1489 = vcmask 34816
        %v1490 = vsel %vm1489, %v1482, 0.0
        %1491 = vadd.xlane.f32.xlu0 %v1490
        %v1492 = vpop.xlane.xlu0 %1491
        %v1493 = vld [vmem:[#allocation2] sm:$0x1]
        %v1494 = vld [vmem:[%s630] sm:$0xff]
        %v1495 = vld [vmem:[%s630 + $0x8] sm:$0x7]
        %v1496 = vmul.f32 %v1488, %v1494
        %v1497 = vmul.f32 %v1492, %v1495
        %vm1498 = vcmask 130048
        %v1499 = vsel %vm1498, %v1496, 0.0
        %vm1500 = vcmask 124928
        %v1501 = vsel %vm1500, %v1497, 0.0
        %v1502 = vadd.f32 %v1499, %v1501
        %v1503 = vrot.slane %v1502, 4
        %v1504 = vadd.f32 %v1502, %v1503
        %v1505 = vrot.slane %v1504, 2
        %v1506 = vadd.f32 %v1504, %v1505
        %v1507 = vrot.slane %v1506, 1
        %v1508 = vadd.f32 %v1506, %v1507
        %v1509 = vadd.f32 %v1493, %v1508
        %vm1510 = vcmask 122880
        %1511 = vst.msk [vmem:[#allocation2] sm:$0x1] %vm1510, %v1509
        %p1512 = scmp.eq.s32.totalorder %s49, 1
        // Predicated region
        $region117: #{cedr_knrm_forward.1} parent=67 // pred_check
          %p1513 = pneg %p1512
        $region118: #{cedr_knrm_forward.1} parent=67 // pred_check_branch
          %1515 = sbr.rel (%p1513) target = $region120
        $region119: #{cedr_knrm_forward.1} parent=67 // pred_region
          %v1516 = vld [vmem:[#allocation2] sm:$0x1]
          %v1517 = vld [vmem:[#allocation22] sm:$0xff]
          %v1518 = vld [vmem:[#allocation22 + $0x8] sm:$0xff]
          %v1519 = vld [vmem:[#allocation5] sm:$0x1]
          %v1521 = vsel %vm1498, %v1516, 0
          %1523 = vmatprep.subr.mxu0 0.0
          %1524 = vmatpush1.msra.mxu0 %v1517
          %1525 = vmatprep.subr.mxu0 0.0
          %1526 = vmatpush1.msra.mxu0 %v1518
          %1527 = vmatprep.subr.mxu0 0.0
          %1528 = vmatpush1.msra.mxu0 0.0
          %1529 = vmatprep.subr.mxu0 0.0
          %1530 = vmatpush1.msra.mxu0 0.0
          %1531 = vmatprep.subr.mxu0 0.0
          %1532 = vmatpush1.msra.mxu0 0.0
          %1533 = vmatprep.subr.mxu0 0.0
          %1534 = vmatpush1.msra.mxu0 0.0
          %1535 = vmatprep.subr.mxu0 0.0
          %1536 = vmatpush1.msra.mxu0 0.0
          %1537 = vmatprep.subr.mxu0 0.0
          %1538 = vmatpush1.msra.mxu0 0.0
          %1539 = vmatprep.subr.mxu0 0.0
          %1540 = vmatpush1.msra.mxu0 0.0
          %1541 = vmatprep.subr.mxu0 0.0
          %1542 = vmatpush1.msra.mxu0 0.0
          %1543 = vmatprep.subr.mxu0 0.0
          %1544 = vmatpush1.msra.mxu0 0.0
          %1545 = vmatprep.subr.mxu0 0.0
          %1546 = vmatpush1.msra.mxu0 0.0
          %1547 = vmatprep.subr.mxu0 0.0
          %1548 = vmatpush1.msra.mxu0 0.0
          %1549 = vmatprep.subr.mxu0 0.0
          %1550 = vmatpush1.msra.mxu0 0.0
          %1551 = vmatprep.subr.mxu0 0.0
          %1552 = vmatpush1.msra.mxu0 0.0
          %1553 = vmatprep.subr.mxu0 0.0
          %1554 = vmatpush1.msra.mxu0 0.0
          %1555 = vmatprep.subr.mxu0 0.0
          %1556 = vmatpush1.msra.mxu0 0.0
          %1557 = vmatprep.subr.mxu0 0.0
          %1558 = vmatpush1.msra.mxu0 0.0
          %1559 = vmatprep.subr.mxu0 0.0
          %1560 = vmatpush1.msra.mxu0 0.0
          %1561 = vmatprep.subr.mxu0 0.0
          %1562 = vmatpush1.msra.mxu0 0.0
          %1563 = vmatprep.subr.mxu0 0.0
          %1564 = vmatpush1.msra.mxu0 0.0
          %1565 = vmatprep.subr.mxu0 0.0
          %1566 = vmatpush1.msra.mxu0 0.0
          %1567 = vmatprep.subr.mxu0 0.0
          %1568 = vmatpush1.msra.mxu0 0.0
          %1569 = vmatprep.subr.mxu0 0.0
          %1570 = vmatpush1.msra.mxu0 0.0
          %1571 = vmatprep.subr.mxu0 0.0
          %1572 = vmatpush1.msra.mxu0 0.0
          %1573 = vmatprep.subr.mxu0 0.0
          %1574 = vmatpush1.msra.mxu0 0.0
          %1575 = vmatprep.subr.mxu0 0.0
          %1576 = vmatpush1.msra.mxu0 0.0
          %1577 = vmatprep.subr.mxu0 0.0
          %1578 = vmatpush1.msra.mxu0 0.0
          %1579 = vmatprep.subr.mxu0 0.0
          %1580 = vmatpush1.msra.mxu0 0.0
          %1581 = vmatprep.subr.mxu0 0.0
          %1582 = vmatpush1.msra.mxu0 0.0
          %1583 = vmatprep.subr.mxu0 0.0
          %1584 = vmatpush1.msra.mxu0 0.0
          %1585 = vmatprep.subr.mxu0 0.0
          %1586 = vmatpush1.msra.mxu0 0.0
          %1587 = vmatprep.mubr.f32.mxu0 0.0
          %1588 = vmatmul.mubr.f32.gmra.mrb[0].mxu0 %v1521
          %v1589 = vpop.f32.mrb[0].mxu0
          %v1590 = vadd.f32 %v1519, %v1589
          %v1591 = vpop.f32.mrb[0].mxu0
          %1592 = vdwg.mxu0
          %vm1593 = vcmask 0
          %1594 = vst.msk [vmem:[%s699] sm:$0x1] %vm1593, %v1590
        $region120: #{cedr_knrm_forward.1} parent=67 // pred_fallthru
          _
        %s1595 = sand.u32 %s350, 1
        %s1596 = scalar_lea.sflag [#allocation8], %s1595
        %s1597 = sand.u32 %s350, 1
        %s1598 = scalar_lea.vmem [#allocation23], %s1597
        // Predicated region
        $region121: #{cedr_knrm_forward.1} parent=67 // pred_check
          %p1599 = pneg %p360
        $region122: #{cedr_knrm_forward.1} parent=67 // pred_check_branch
          %1601 = sbr.rel (%p1599) target = $region124
        $region123: #{cedr_knrm_forward.1} parent=67 // pred_region
          %s1603 = ssub.s32 16, 16
          %1604 = vsyncadd %s1596, %s1603
          %s1605 = smul.addr %s48, 16
          %s1606 = scalar_lea.hbm %s13, %s1605
          %s1608 = sshll.u32 %s1598, 4
          %s1609 = int_to_ptr.vmem [resolvable:$true] %s1608
          %1611 = dma.vmem_to_hbm [thread:$0]  %s1609, 16, %s1606, %s1596
        $region124: #{cedr_knrm_forward.1} parent=67 // pred_fallthru
          _
      $region68: #{cedr_knrm_forward.1} parent=5 // pred_fallthru
        _
      %p1612 = scmp.le.s32.totalorder 2, %s39
      // Predicated region
      $region125: #{cedr_knrm_forward.1} parent=5 // pred_check
        %p1613 = pneg %p1612
      $region126: #{cedr_knrm_forward.1} parent=5 // pred_check_branch
        %1615 = sbr.rel (%p1613) target = $region128
      $region127: #{cedr_knrm_forward.1} parent=5 // pred_region
        %s1616 = ssub.s32 %s39, 2
        // Predicated region
        $region129: #{cedr_knrm_forward.1} parent=127 // pred_check
          %p1617 = pneg %p366
        $region130: #{cedr_knrm_forward.1} parent=127 // pred_check_branch
          %1619 = sbr.rel (%p1617) target = $region132
        $region131: #{cedr_knrm_forward.1} parent=127 // pred_region
          %s1620 = sand.u32 %s351, 1
          %s1621 = scalar_lea.sflag [#allocation8], %s1620
          %s1622 = sand.u32 %s351, 1
          %s1623 = scalar_lea.vmem [#allocation23], %s1622
          %1624 = dma.done %s1621, 16
        $region132: #{cedr_knrm_forward.1} parent=127 // pred_fallthru
          _
      $region128: #{cedr_knrm_forward.1} parent=5 // pred_fallthru
        _
    $region6: #{cedr_knrm_forward.1} parent=1 // loop_footer
      %s43 = sadd.s32 1, %s39
    $region7: #{cedr_knrm_forward.1} parent=1 // loop_footer_branch
      %38 = sbr.rel target = $region3
    $region8: #{cedr_knrm_forward.1} parent=1 // loop_exit
      _
    %1625 = vsyncpa [#allocation7], 1
    %s1626 = scalar_lea.sflag [#allocation7], 1
    %1627 = vsyncpa %s1626, 1
    %1628 = vsyncpa [#allocation10], 1
    %s1629 = scalar_lea.sflag [#allocation10], 1
    %1630 = vsyncpa %s1629, 1
    %1631 = vsyncpa [#allocation13], 1
    %s1632 = scalar_lea.sflag [#allocation13], 1
    %1633 = vsyncpa %s1632, 1
    %1634 = vsyncpa [#allocation16], 1
    %1635 = vsyncpa [#allocation19], 1
    %1636 = vsyncpa [#allocation8], 1
    %s1637 = scalar_lea.sflag [#allocation8], 1
    %1638 = vsyncpa %s1637, 1

</llo_original>
